<compile_context>
chip_gen: v5e
topology: v5e:2x2
jax: 0.10.0
libtpu: 0.0.40
codegen_flags: <defaults>
</compile_context>

<pallas_src>
import jax
import jax.numpy as jnp
from jax import lax
from jax.experimental import pallas as pl
from jax.experimental.pallas import tpu as pltpu


_T_TILE = 512  # T rows per grid step


def _round_up(x, m):
    return ((x + m - 1) // m) * m


# --------------------------------------------------------------------------- #
# One-off probe: direction (and availability) of pltpu.roll on this backend.
# --------------------------------------------------------------------------- #
_ROLL_DIR_CACHE = "unset"


def _probe_roll_direction():
    """True  -> pltpu.roll matches jnp.roll (data moves to higher indices),
       False -> opposite direction,
       None  -> pltpu.roll unusable; fall back to slice+concat shifts."""
    global _ROLL_DIR_CACHE
    if _ROLL_DIR_CACHE == "unset":
        try:
            def k(o_ref):
                o_ref[...] = pltpu.roll(
                    lax.broadcasted_iota(jnp.int32, (8, 128), 0), shift=1, axis=0)

            r = jax.block_until_ready(
                pl.pallas_call(
                    k, out_shape=jax.ShapeDtypeStruct((8, 128), jnp.int32))())
            v = int(r[1, 0])
            _ROLL_DIR_CACHE = True if v == 0 else (False if v == 2 else None)
        except Exception:
            _ROLL_DIR_CACHE = None
    return _ROLL_DIR_CACHE


# --------------------------------------------------------------------------- #
# Fused kernel: conv stack (+ReLU, exact "same" padding) + folded head.
# --------------------------------------------------------------------------- #
def _make_fused_kernel(n_layers, t_tile, d, c, t_real, r0, shift_impl):
    """Kernel over a (r0 = t_tile + 2*n_layers, padded to 8) row window.

    The window keeps a constant r0 rows through all layers; output row r of
    layer l corresponds to global T index  tj*t_tile - (n_layers-1-l) + r.
    Rows shifted in by the wrap-around of shift_up land at indices >= t_tile
    after the last layer and are never consumed by the head.
    """

    if shift_impl == "slice":
        def shift_up(x, k):                      # y[i] = x[(i + k) % r0]
            return jnp.concatenate([x[k:], x[:k]], axis=0)
    else:
        like_jnp = (shift_impl == "roll_jnp")

        def shift_up(x, k):                      # y[i] = x[(i + k) % r0]
            s = (r0 - k) if like_jnp else k
            return pltpu.roll(x, shift=s, axis=0)

    def kernel(len_ref, x_ref, *refs):
        # refs = (w_0, b_0, ..., w_{L-1}, b_{L-1}, w_head, b_head, o_ref)
        o_ref = refs[-1]                         # (8, t_tile) f32
        b_head_ref = refs[-2]                    # (1, 1) f32 in SMEM
        w_head_ref = refs[-3]                    # (8, D*C) bf16 (identical rows)
        layer_refs = refs[:-3]

        bi = pl.program_id(0)
        tj = pl.program_id(1)

        row = lax.broadcasted_iota(jnp.int32, (r0, 1), 0)
        hf = x_ref[...].astype(jnp.float32)      # (r0, D)

        for l in range(n_layers):
            w_ref = layer_refs[2 * l]            # (3, k_in, D*C) bf16
            b_ref = layer_refs[2 * l + 1]        # (1, D*C) f32
            # Three T taps: unshifted + two XLU row-shifts (no realigned copies).
            a0 = hf.astype(jnp.bfloat16)
            a1 = shift_up(hf, 1).astype(jnp.bfloat16)
            a2 = shift_up(hf, 2).astype(jnp.bfloat16)
            acc = jnp.dot(a0, w_ref[0], preferred_element_type=jnp.float32)
            acc = acc + jnp.dot(a1, w_ref[1], preferred_element_type=jnp.float32)
            acc = acc + jnp.dot(a2, w_ref[2], preferred_element_type=jnp.float32)
            hf = jnp.maximum(acc + b_ref[...], 0.0)
            # Exact "same" semantics across fused layers: rows whose global T
            # index falls outside [0, T) must be zero before the next layer
            # reads them (cheap VPU mask under an MXU-bound loop).
            g = tj * t_tile - (n_layers - 1 - l) + row
            hf = jnp.where((g >= 0) & (g < t_real), hf, 0.0)

        # Folded head: sigmoid(y @ (w_proj @ w_out) + (b_proj @ w_out + b_out)).
        # Only the first t_tile rows (this tile's global rows) are used, so the
        # wrap-around rows of shift_up never reach the output.
        a_fin = hf[:t_tile, :].astype(jnp.bfloat16)
        logits = lax.dot_general(
            w_head_ref[...], a_fin,
            dimension_numbers=(((1,), (1,)), ((), ())),
            preferred_element_type=jnp.float32)              # (8, t_tile)
        alphas = jax.nn.sigmoid(logits + b_head_ref[0, 0])
        col = tj * t_tile + lax.broadcasted_iota(jnp.int32, (8, t_tile), 1)
        o_ref[...] = jnp.where(col < len_ref[bi], alphas, 0.0)

    return kernel


# --------------------------------------------------------------------------- #
# Weight preprocessing (done once at init, in plain JAX).
# --------------------------------------------------------------------------- #
def _densify_conv_weight(w, d):
    """(3, 3, Cin, Cout) 3x3 'same' kernel -> per-T-tap dense matrices
    (3, D*Cin, D*Cout) acting on the flattened (D, channel) feature axis.
    D taps falling outside [0, D) are dropped (their input is the zero 'same'
    padding), so no zero halo columns are carried in K or N."""
    _, _, cin, cout = w.shape
    wb = jnp.zeros((3, d * cin, d * cout), w.dtype)
    for dd in range(3):                  # kernel tap along D
        for dcol in range(d):            # output D column
            ic = dcol + dd - 1           # input D column
            if 0 <= ic < d:
                wb = wb.at[:, ic * cin:(ic + 1) * cin,
                              dcol * cout:(dcol + 1) * cout].set(w[:, dd])
    return wb


def _densify_bias(b, d):
    cout = b.shape[0]
    return jnp.tile(b, d).reshape(1, d * cout)


# --------------------------------------------------------------------------- #
# Module
# --------------------------------------------------------------------------- #
class AttentionAssigner2D:
    """JAX/Pallas port of Attention_Assigner_2D (inference semantics)."""

    def __init__(self, config, key):
        self.d_input = config["d_model"]
        self.d_model = config["d_model"]
        self.n_layers = config["n_layers"]
        self.dropout_rate = config["dropout"]   # identity at inference
        self._shift_impl = None                 # resolved on the first call

        c, d = self.d_model, self.d_input
        keys = jax.random.split(key, 2 * self.n_layers + 4)
        conv_params = []
        for i in range(self.n_layers):
            cin = 1 if i == 0 else c
            w = 0.1 * jax.random.normal(keys[2 * i], (3, 3, cin, c), jnp.float32)
            b = 0.01 * jax.random.normal(keys[2 * i + 1], (c,), jnp.float32)
            conv_params.append((w, b))
        f = c * d
        w_proj = 0.05 * jax.random.normal(keys[-4], (f, c), jnp.float32)
        b_proj = 0.01 * jax.random.normal(keys[-3], (1, c), jnp.float32)
        w_out = 0.1 * jax.random.normal(keys[-2], (c, 1), jnp.float32)
        b_out = 0.01 * jax.random.normal(keys[-1], (1, 1), jnp.float32)

        self.conv_params = conv_params
        self.head_params = (w_proj, b_proj, w_out, b_out)

        # Kernel-ready operands: per-T-tap dense conv matrices (bf16) over the
        # flattened (D, channel) feature axis (width D*C), f32 biases, and the
        # folded (projection @ Linear(d_model,1)) head vector.
        self.kernel_layer_ops = []
        for (w, b) in conv_params:
            self.kernel_layer_ops.append(
                _densify_conv_weight(w, d).astype(jnp.bfloat16))
            self.kernel_layer_ops.append(
                _densify_bias(b, d).astype(jnp.float32))

        w_fold = (w_proj @ w_out)[:, 0]                           # (D*C,)
        b_fold = (b_proj @ w_out)[0, 0] + b_out[0, 0]
        # 8 identical rows -> the head dot naturally produces a sublane/lane
        # dense (8, T_tile) block for an unmasked store.
        self.w_head = jnp.broadcast_to(w_fold, (8, d * c)).astype(jnp.bfloat16)
        self.b_head = jnp.reshape(b_fold, (1, 1)).astype(jnp.float32)

    # ------------------------------------------------------------------ #
    def _launch(self, lens, x_tiles, n, t, d, t_tile, num_tiles, r0, shift_impl):
        c = self.d_model
        L = self.n_layers
        kernel = _make_fused_kernel(L, t_tile, d, c, t, r0, shift_impl)

        in_specs = [pl.BlockSpec((None, None, r0, d),
                                 lambda i, j, lens: (i, j, 0, 0))]
        for l in range(L):
            k_in = d * (1 if l == 0 else c)
            in_specs.append(pl.BlockSpec((3, k_in, d * c),
                                         lambda i, j, lens: (0, 0, 0)))
            in_specs.append(pl.BlockSpec((1, d * c),
                                         lambda i, j, lens: (0, 0)))
        in_specs.append(pl.BlockSpec((8, d * c), lambda i, j, lens: (0, 0)))
        in_specs.append(pl.BlockSpec(memory_space=pltpu.MemorySpace.SMEM))

        return pl.pallas_call(
            kernel,
            out_shape=jax.ShapeDtypeStruct((n, num_tiles, 8, t_tile), jnp.float32),
            grid_spec=pltpu.PrefetchScalarGridSpec(
                num_scalar_prefetch=1,
                grid=(n, num_tiles),
                in_specs=in_specs,
                out_specs=pl.BlockSpec((None, None, 8, t_tile),
                                       lambda i, j, lens: (i, j, 0, 0)),
            ),
            compiler_params=pltpu.CompilerParams(
                dimension_semantics=("parallel", "parallel")),
        )(lens, x_tiles, *self.kernel_layer_ops, self.w_head, self.b_head)

    # ------------------------------------------------------------------ #
    def __call__(self, padded_input, input_lengths):
        n, t, d = padded_input.shape
        L = self.n_layers

        t_tile = min(_T_TILE, t)
        # v7x megacore: keep >= 2 grid programs whenever possible.
        if n * pl.cdiv(t, t_tile) < 2 and t >= 16:
            t_tile = _round_up(pl.cdiv(t, 2), 8)
        num_tiles = pl.cdiv(t, t_tile)
        t_pad = num_tiles * t_tile
        r0 = _round_up(t_tile + 2 * L, 8)

        # Haloed, overlapping T windows gathered once on the host (bf16).
        t_total = (num_tiles - 1) * t_tile + r0
        xp = jnp.pad(padded_input, ((0, 0), (L, t_total - L - t), (0, 0)))
        row_idx = (jnp.arange(num_tiles) * t_tile)[:, None] + jnp.arange(r0)[None, :]
        x_tiles = xp[:, row_idx, :].astype(jnp.bfloat16)        # (N, nt, r0, D)

        lens = input_lengths.astype(jnp.int32)

        if self._shift_impl is not None:
            out = self._launch(lens, x_tiles, n, t, d, t_tile, num_tiles, r0,
                               self._shift_impl)
        else:
            trials = []
            roll_dir = _probe_roll_direction()
            if roll_dir is not None:
                trials.append("roll_jnp" if roll_dir else "roll_rev")
            trials.append("slice")                 # always-correct fallback
            out, err = None, None
            for impl in trials:
                try:
                    out = jax.block_until_ready(
                        self._launch(lens, x_tiles, n, t, d, t_tile,
                                     num_tiles, r0, impl))
                    self._shift_impl = impl
                    break
                except Exception as e:             # lowering unsupported -> next
                    err = e
            if out is None:
                raise err

        # Row 0 of the 8 replicated sublane rows carries the alphas.
        return out[:, :, 0, :].reshape(n, t_pad)[:, :t]


# --------------------------------------------------------------------------- #
# Pure-JAX f32 reference (same assumed Conv2d semantics), for self-checking.
# --------------------------------------------------------------------------- #
def _reference_forward(model, padded_input, input_lengths):
    x = padded_input[..., None]                                 # (N, T, D, 1)
    n, t, d, _ = x.shape
    for (w, b) in model.conv_params:
        xp = jnp.pad(x, ((0, 0), (1, 1), (1, 1), (0, 0)))
        y = sum(jnp.einsum("ntdc,ce->ntde",
                           xp[:, dt:dt + t, dd:dd + d, :], w[dt, dd])
                for dt in range(3) for dd in range(3))
        x = jnp.maximum(y + b, 0.0)
    w_proj, b_proj, w_out, b_out = model.head_params
    y = x.reshape(n, t, d * model.d_model)
    h = y @ w_proj + b_proj                                     # dropout = identity
    logits = (h @ w_out + b_out)[..., 0]
    alphas = jax.nn.sigmoid(logits)
    mask = (jnp.arange(t)[None, :] < input_lengths[:, None]).astype(alphas.dtype)
    return alphas * mask


# --------------------------------------------------------------------------- #
if __name__ == "__main__":
    config = dict(d_model=16, n_layers=2, w_context=3, dropout=0.1)
    key = jax.random.PRNGKey(0)
    k_param, k1, k2, k3 = jax.random.split(key, 4)

    model = AttentionAssigner2D(config, k_param)
    D = config["d_model"]

    # 1) tiny single-tile case
    N, T = 2, 8
    x = jax.random.normal(k1, (N, T, D), jnp.float32)
    lens = jnp.array([8, 5], dtype=jnp.int32)
    a = jax.block_until_ready(model(x, lens))
    assert a.shape == (N, T), a.shape
    assert bool(jnp.all(a[1, 5:] == 0.0))                      # masked past length
    assert bool(jnp.all((a >= 0.0) & (a <= 1.0)))
    err = float(jnp.max(jnp.abs(a - _reference_forward(model, x, lens))))
    assert err < 5e-2, f"mismatch vs f32 reference: {err}"

    # 2) multi-tile case (T > _T_TILE)
    N, T = 2, 700
    x = jax.random.normal(k2, (N, T, D), jnp.float32)
    lens = jnp.array([700, 345], dtype=jnp.int32)
    a = jax.block_until_ready(model(x, lens))
    assert a.shape == (N, T), a.shape
    assert bool(jnp.all(a[1, 345:] == 0.0))
    err = float(jnp.max(jnp.abs(a - _reference_forward(model, x, lens))))
    assert err < 5e-2, f"multi-tile mismatch vs f32 reference: {err}"

    # 3) batch of one with odd T (exercises the >=2-tile megacore split)
    N, T = 1, 45
    x = jax.random.normal(k3, (N, T, D), jnp.float32)
    lens = jnp.array([30], dtype=jnp.int32)
    a = jax.block_until_ready(model(x, lens))
    assert a.shape == (N, T), a.shape
    assert bool(jnp.all(a[0, 30:] == 0.0))
    err = float(jnp.max(jnp.abs(a - _reference_forward(model, x, lens))))
    assert err < 5e-2, f"N=1 mismatch vs f32 reference: {err}"

    print("KERNEL_OK")
</pallas_src>

<mosaic_0001>
module attributes {stable_mosaic.version = 11 : i64} {
  func.func @kernel(%arg0: i32, %arg1: i32, %arg2: memref<2xi32, #tpu.memory_space<smem>>, %arg3: memref<1x1x16x16xbf16, #tpu.memory_space<vmem>>, %arg4: memref<3x16x256xbf16, #tpu.memory_space<vmem>>, %arg5: memref<1x256xf32, #tpu.memory_space<vmem>>, %arg6: memref<3x256x256xbf16, #tpu.memory_space<vmem>>, %arg7: memref<1x256xf32, #tpu.memory_space<vmem>>, %arg8: memref<8x256xbf16, #tpu.memory_space<vmem>>, %arg9: memref<1x1xf32, #tpu.memory_space<smem>>, %arg10: memref<1x1x8x8xf32, #tpu.memory_space<vmem>>) attributes {dimension_semantics = [#tpu.dimension_semantics<parallel>, #tpu.dimension_semantics<parallel>], iteration_bounds = array<i64: 2, 1>, scalar_prefetch = 1 : i64, scratch_operands = 0 : i64, tpu.core_type = #tpu.core_type<tc>, window_params = [{transform_indices = @transform_0, window_bounds = array<i64: 1, 1, 16, 16>}, {pipeline_mode = #tpu.pipeline_mode<synchronous>, transform_indices = @transform_1, window_bounds = array<i64: 3, 16, 256>}, {pipeline_mode = #tpu.pipeline_mode<synchronous>, transform_indices = @transform_2, window_bounds = array<i64: 1, 256>}, {pipeline_mode = #tpu.pipeline_mode<synchronous>, transform_indices = @transform_3, window_bounds = array<i64: 3, 256, 256>}, {pipeline_mode = #tpu.pipeline_mode<synchronous>, transform_indices = @transform_4, window_bounds = array<i64: 1, 256>}, {pipeline_mode = #tpu.pipeline_mode<synchronous>, transform_indices = @transform_5, window_bounds = array<i64: 8, 256>}, {transform_indices = @transform_6, window_bounds = array<i64: 1, 1>}, {transform_indices = @transform_7, window_bounds = array<i64: 1, 1, 8, 8>}]} {
    %0 = tpu.iota {dimensions = array<i32: 0>} : vector<16x1xi32>
    %c0 = arith.constant 0 : index
    %c0_0 = arith.constant 0 : index
    %c0_1 = arith.constant 0 : index
    %c0_2 = arith.constant 0 : index
    %1 = vector.load %arg3[%c0, %c0_0, %c0_1, %c0_2] : memref<1x1x16x16xbf16, #tpu.memory_space<vmem>>, vector<1x1x16x16xbf16>
    %2 = vector.shape_cast %1 : vector<1x1x16x16xbf16> to vector<16x16xbf16>
    %3 = arith.extf %2 : vector<16x16xbf16> to vector<16x16xf32>
    %4 = arith.truncf %3 : vector<16x16xf32> to vector<16x16xbf16>
    %5 = vector.extract_strided_slice %3 {offsets = [1, 0], sizes = [15, 16], strides = [1, 1]} : vector<16x16xf32> to vector<15x16xf32>
    %6 = vector.extract_strided_slice %3 {offsets = [0, 0], sizes = [1, 16], strides = [1, 1]} : vector<16x16xf32> to vector<1x16xf32>
    %7 = tpu.concatenate %5, %6 in 0 : vector<15x16xf32>, vector<1x16xf32> -> vector<16x16xf32>
    %8 = arith.truncf %7 : vector<16x16xf32> to vector<16x16xbf16>
    %9 = vector.extract_strided_slice %3 {offsets = [2, 0], sizes = [14, 16], strides = [1, 1]} : vector<16x16xf32> to vector<14x16xf32>
    %10 = vector.extract_strided_slice %3 {offsets = [0, 0], sizes = [2, 16], strides = [1, 1]} : vector<16x16xf32> to vector<2x16xf32>
    %11 = tpu.concatenate %9, %10 in 0 : vector<14x16xf32>, vector<2x16xf32> -> vector<16x16xf32>
    %12 = arith.truncf %11 : vector<16x16xf32> to vector<16x16xbf16>
    %c0_3 = arith.constant 0 : index
    %c0_4 = arith.constant 0 : index
    %c0_5 = arith.constant 0 : index
    %13 = vector.load %arg4[%c0_3, %c0_4, %c0_5] : memref<3x16x256xbf16, #tpu.memory_space<vmem>>, vector<1x16x256xbf16>
    %14 = vector.shape_cast %13 : vector<1x16x256xbf16> to vector<16x256xbf16>
    %cst = arith.constant dense<0.000000e+00> : vector<16x256xf32>
    %15 = tpu.matmul %4, %14, %cst {dimension_numbers = #tpu.dot_dimension_numbers<[1], [0], [0], [1], [0, 0, 1, 1], [], []>} : vector<16x16xbf16>, vector<16x256xbf16>, vector<16x256xf32> -> vector<16x256xf32>
    %c1 = arith.constant 1 : index
    %c0_6 = arith.constant 0 : index
    %c0_7 = arith.constant 0 : index
    %16 = vector.load %arg4[%c1, %c0_6, %c0_7] : memref<3x16x256xbf16, #tpu.memory_space<vmem>>, vector<1x16x256xbf16>
    %17 = vector.shape_cast %16 : vector<1x16x256xbf16> to vector<16x256xbf16>
    %cst_8 = arith.constant dense<0.000000e+00> : vector<16x256xf32>
    %18 = tpu.matmul %8, %17, %cst_8 {dimension_numbers = #tpu.dot_dimension_numbers<[1], [0], [0], [1], [0, 0, 1, 1], [], []>} : vector<16x16xbf16>, vector<16x256xbf16>, vector<16x256xf32> -> vector<16x256xf32>
    %19 = arith.addf %15, %18 : vector<16x256xf32>
    %c2 = arith.constant 2 : index
    %c0_9 = arith.constant 0 : index
    %c0_10 = arith.constant 0 : index
    %20 = vector.load %arg4[%c2, %c0_9, %c0_10] : memref<3x16x256xbf16, #tpu.memory_space<vmem>>, vector<1x16x256xbf16>
    %21 = vector.shape_cast %20 : vector<1x16x256xbf16> to vector<16x256xbf16>
    %cst_11 = arith.constant dense<0.000000e+00> : vector<16x256xf32>
    %22 = tpu.matmul %12, %21, %cst_11 {dimension_numbers = #tpu.dot_dimension_numbers<[1], [0], [0], [1], [0, 0, 1, 1], [], []>} : vector<16x16xbf16>, vector<16x256xbf16>, vector<16x256xf32> -> vector<16x256xf32>
    %23 = arith.addf %19, %22 : vector<16x256xf32>
    %c0_12 = arith.constant 0 : index
    %c0_13 = arith.constant 0 : index
    %24 = vector.load %arg5[%c0_12, %c0_13] : memref<1x256xf32, #tpu.memory_space<vmem>>, vector<1x256xf32>
    %25 = vector.broadcast %24 : vector<1x256xf32> to vector<16x256xf32>
    %26 = arith.addf %23, %25 : vector<16x256xf32>
    %cst_14 = arith.constant 0.000000e+00 : f32
    %27 = vector.broadcast %cst_14 : f32 to vector<16x256xf32>
    %28 = arith.maximumf %26, %27 : vector<16x256xf32>
    %c8_i32 = arith.constant 8 : i32
    %29 = arith.muli %arg1, %c8_i32 : i32
    %c1_i32 = arith.constant 1 : i32
    %30 = arith.subi %29, %c1_i32 : i32
    %31 = vector.broadcast %30 : i32 to vector<16x1xi32>
    %32 = arith.addi %31, %0 : vector<16x1xi32>
    %c0_i32 = arith.constant 0 : i32
    %33 = vector.broadcast %c0_i32 : i32 to vector<16x1xi32>
    %34 = arith.cmpi sge, %32, %33 : vector<16x1xi32>
    %c8_i32_15 = arith.constant 8 : i32
    %35 = vector.broadcast %c8_i32_15 : i32 to vector<16x1xi32>
    %36 = arith.cmpi slt, %32, %35 : vector<16x1xi32>
    %37 = arith.andi %34, %36 : vector<16x1xi1>
    %cst_16 = arith.constant 0.000000e+00 : f32
    %38 = vector.shape_cast %37 : vector<16x1xi1> to vector<16x1xi1>
    %39 = vector.broadcast %38 : vector<16x1xi1> to vector<16x256xi1>
    %40 = vector.broadcast %cst_16 : f32 to vector<16x256xf32>
    %41 = arith.select %39, %28, %40 : vector<16x256xi1>, vector<16x256xf32>
    %42 = arith.truncf %41 : vector<16x256xf32> to vector<16x256xbf16>
    %43 = vector.extract_strided_slice %41 {offsets = [1, 0], sizes = [15, 256], strides = [1, 1]} : vector<16x256xf32> to vector<15x256xf32>
    %44 = vector.extract_strided_slice %41 {offsets = [0, 0], sizes = [1, 256], strides = [1, 1]} : vector<16x256xf32> to vector<1x256xf32>
    %45 = tpu.concatenate %43, %44 in 0 : vector<15x256xf32>, vector<1x256xf32> -> vector<16x256xf32>
    %46 = arith.truncf %45 : vector<16x256xf32> to vector<16x256xbf16>
    %47 = vector.extract_strided_slice %41 {offsets = [2, 0], sizes = [14, 256], strides = [1, 1]} : vector<16x256xf32> to vector<14x256xf32>
    %48 = vector.extract_strided_slice %41 {offsets = [0, 0], sizes = [2, 256], strides = [1, 1]} : vector<16x256xf32> to vector<2x256xf32>
    %49 = tpu.concatenate %47, %48 in 0 : vector<14x256xf32>, vector<2x256xf32> -> vector<16x256xf32>
    %50 = arith.truncf %49 : vector<16x256xf32> to vector<16x256xbf16>
    %c0_17 = arith.constant 0 : index
    %c0_18 = arith.constant 0 : index
    %c0_19 = arith.constant 0 : index
    %51 = vector.load %arg6[%c0_17, %c0_18, %c0_19] : memref<3x256x256xbf16, #tpu.memory_space<vmem>>, vector<1x256x256xbf16>
    %52 = vector.shape_cast %51 : vector<1x256x256xbf16> to vector<256x256xbf16>
    %cst_20 = arith.constant dense<0.000000e+00> : vector<16x256xf32>
    %53 = tpu.matmul %42, %52, %cst_20 {dimension_numbers = #tpu.dot_dimension_numbers<[1], [0], [0], [1], [0, 0, 1, 1], [], []>} : vector<16x256xbf16>, vector<256x256xbf16>, vector<16x256xf32> -> vector<16x256xf32>
    %c1_21 = arith.constant 1 : index
    %c0_22 = arith.constant 0 : index
    %c0_23 = arith.constant 0 : index
    %54 = vector.load %arg6[%c1_21, %c0_22, %c0_23] : memref<3x256x256xbf16, #tpu.memory_space<vmem>>, vector<1x256x256xbf16>
    %55 = vector.shape_cast %54 : vector<1x256x256xbf16> to vector<256x256xbf16>
    %cst_24 = arith.constant dense<0.000000e+00> : vector<16x256xf32>
    %56 = tpu.matmul %46, %55, %cst_24 {dimension_numbers = #tpu.dot_dimension_numbers<[1], [0], [0], [1], [0, 0, 1, 1], [], []>} : vector<16x256xbf16>, vector<256x256xbf16>, vector<16x256xf32> -> vector<16x256xf32>
    %57 = arith.addf %53, %56 : vector<16x256xf32>
    %c2_25 = arith.constant 2 : index
    %c0_26 = arith.constant 0 : index
    %c0_27 = arith.constant 0 : index
    %58 = vector.load %arg6[%c2_25, %c0_26, %c0_27] : memref<3x256x256xbf16, #tpu.memory_space<vmem>>, vector<1x256x256xbf16>
    %59 = vector.shape_cast %58 : vector<1x256x256xbf16> to vector<256x256xbf16>
    %cst_28 = arith.constant dense<0.000000e+00> : vector<16x256xf32>
    %60 = tpu.matmul %50, %59, %cst_28 {dimension_numbers = #tpu.dot_dimension_numbers<[1], [0], [0], [1], [0, 0, 1, 1], [], []>} : vector<16x256xbf16>, vector<256x256xbf16>, vector<16x256xf32> -> vector<16x256xf32>
    %61 = arith.addf %57, %60 : vector<16x256xf32>
    %c0_29 = arith.constant 0 : index
    %c0_30 = arith.constant 0 : index
    %62 = vector.load %arg7[%c0_29, %c0_30] : memref<1x256xf32, #tpu.memory_space<vmem>>, vector<1x256xf32>
    %63 = vector.broadcast %62 : vector<1x256xf32> to vector<16x256xf32>
    %64 = arith.addf %61, %63 : vector<16x256xf32>
    %cst_31 = arith.constant 0.000000e+00 : f32
    %65 = vector.broadcast %cst_31 : f32 to vector<16x256xf32>
    %66 = arith.maximumf %64, %65 : vector<16x256xf32>
    %c8_i32_32 = arith.constant 8 : i32
    %67 = arith.muli %arg1, %c8_i32_32 : i32
    %c0_i32_33 = arith.constant 0 : i32
    %68 = arith.subi %67, %c0_i32_33 : i32
    %69 = vector.broadcast %68 : i32 to vector<16x1xi32>
    %70 = arith.addi %69, %0 : vector<16x1xi32>
    %c0_i32_34 = arith.constant 0 : i32
    %71 = vector.broadcast %c0_i32_34 : i32 to vector<16x1xi32>
    %72 = arith.cmpi sge, %70, %71 : vector<16x1xi32>
    %c8_i32_35 = arith.constant 8 : i32
    %73 = vector.broadcast %c8_i32_35 : i32 to vector<16x1xi32>
    %74 = arith.cmpi slt, %70, %73 : vector<16x1xi32>
    %75 = arith.andi %72, %74 : vector<16x1xi1>
    %cst_36 = arith.constant 0.000000e+00 : f32
    %76 = vector.shape_cast %75 : vector<16x1xi1> to vector<16x1xi1>
    %77 = vector.broadcast %76 : vector<16x1xi1> to vector<16x256xi1>
    %78 = vector.broadcast %cst_36 : f32 to vector<16x256xf32>
    %79 = arith.select %77, %66, %78 : vector<16x256xi1>, vector<16x256xf32>
    %80 = vector.extract_strided_slice %79 {offsets = [0, 0], sizes = [8, 256], strides = [1, 1]} : vector<16x256xf32> to vector<8x256xf32>
    %81 = arith.truncf %80 : vector<8x256xf32> to vector<8x256xbf16>
    %c0_37 = arith.constant 0 : index
    %c0_38 = arith.constant 0 : index
    %82 = vector.load %arg8[%c0_37, %c0_38] : memref<8x256xbf16, #tpu.memory_space<vmem>>, vector<8x256xbf16>
    %cst_39 = arith.constant dense<0.000000e+00> : vector<8x8xf32>
    %83 = tpu.matmul %82, %81, %cst_39 {dimension_numbers = #tpu.dot_dimension_numbers<[1], [1], [0], [0], [0, 0, 1, 0], [], []>} : vector<8x256xbf16>, vector<8x256xbf16>, vector<8x8xf32> -> vector<8x8xf32>
    %c0_40 = arith.constant 0 : index
    %c0_41 = arith.constant 0 : index
    %84 = memref.load %arg9[%c0_40, %c0_41] : memref<1x1xf32, #tpu.memory_space<smem>>
    %85 = vector.broadcast %84 : f32 to vector<8x8xf32>
    %86 = arith.addf %83, %85 : vector<8x8xf32>
    %87 = arith.negf %86 : vector<8x8xf32>
    %88 = math.exp %87 : vector<8x8xf32>
    %cst_42 = arith.constant 1.000000e+00 : f32
    %89 = vector.broadcast %cst_42 : f32 to vector<8x8xf32>
    %90 = arith.addf %89, %88 : vector<8x8xf32>
    %91 = arith.divf %89, %90 : vector<8x8xf32>
    %c8_i32_43 = arith.constant 8 : i32
    %92 = arith.muli %arg1, %c8_i32_43 : i32
    %93 = tpu.iota {dimensions = array<i32: 1>} : vector<8x8xi32>
    %94 = vector.broadcast %92 : i32 to vector<8x8xi32>
    %95 = arith.addi %94, %93 : vector<8x8xi32>
    %96 = arith.index_cast %arg0 : i32 to index
    %97 = memref.load %arg2[%96] : memref<2xi32, #tpu.memory_space<smem>>
    %98 = vector.broadcast %97 : i32 to vector<8x8xi32>
    %99 = arith.cmpi slt, %95, %98 : vector<8x8xi32>
    %cst_44 = arith.constant 0.000000e+00 : f32
    %100 = vector.broadcast %cst_44 : f32 to vector<8x8xf32>
    %101 = arith.select %99, %91, %100 : vector<8x8xi1>, vector<8x8xf32>
    %c0_45 = arith.constant 0 : index
    %c0_46 = arith.constant 0 : index
    %c0_47 = arith.constant 0 : index
    %c0_48 = arith.constant 0 : index
    %102 = vector.load %arg10[%c0_45, %c0_46, %c0_47, %c0_48] : memref<1x1x8x8xf32, #tpu.memory_space<vmem>>, vector<1x1x8x8xf32>
    %103 = vector.shape_cast %102 : vector<1x1x8x8xf32> to vector<8x8xf32>
    %104 = vector.shape_cast %101 : vector<8x8xf32> to vector<1x1x8x8xf32>
    tpu.vector_store %arg10[%c0_45, %c0_46, %c0_47, %c0_48], %104 {strides = array<i32>} : memref<1x1x8x8xf32, #tpu.memory_space<vmem>>, vector<1x1x8x8xf32>,
    return
  }
  func.func @transform_0(%arg0: i32, %arg1: i32, %arg2: memref<2xi32, #tpu.memory_space<smem>>) -> (i32, i32, i32, i32) {
    %c0_i32 = arith.constant 0 : i32
    %c0_i32_0 = arith.constant 0 : i32
    %c0_i32_1 = arith.constant 0 : i32
    return %arg0, %arg1, %c0_i32, %c0_i32_0 : i32, i32, i32, i32
  }
  func.func @transform_1(%arg0: i32, %arg1: i32, %arg2: memref<2xi32, #tpu.memory_space<smem>>) -> (i32, i32, i32) {
    %c0_i32 = arith.constant 0 : i32
    %c0_i32_0 = arith.constant 0 : i32
    %c0_i32_1 = arith.constant 0 : i32
    %c0_i32_2 = arith.constant 0 : i32
    return %c0_i32, %c0_i32_0, %c0_i32_1 : i32, i32, i32
  }
  func.func @transform_2(%arg0: i32, %arg1: i32, %arg2: memref<2xi32, #tpu.memory_space<smem>>) -> (i32, i32) {
    %c0_i32 = arith.constant 0 : i32
    %c0_i32_0 = arith.constant 0 : i32
    %c0_i32_1 = arith.constant 0 : i32
    return %c0_i32, %c0_i32_0 : i32, i32
  }
  func.func @transform_3(%arg0: i32, %arg1: i32, %arg2: memref<2xi32, #tpu.memory_space<smem>>) -> (i32, i32, i32) {
    %c0_i32 = arith.constant 0 : i32
    %c0_i32_0 = arith.constant 0 : i32
    %c0_i32_1 = arith.constant 0 : i32
    %c0_i32_2 = arith.constant 0 : i32
    return %c0_i32, %c0_i32_0, %c0_i32_1 : i32, i32, i32
  }
  func.func @transform_4(%arg0: i32, %arg1: i32, %arg2: memref<2xi32, #tpu.memory_space<smem>>) -> (i32, i32) {
    %c0_i32 = arith.constant 0 : i32
    %c0_i32_0 = arith.constant 0 : i32
    %c0_i32_1 = arith.constant 0 : i32
    return %c0_i32, %c0_i32_0 : i32, i32
  }
  func.func @transform_5(%arg0: i32, %arg1: i32, %arg2: memref<2xi32, #tpu.memory_space<smem>>) -> (i32, i32) {
    %c0_i32 = arith.constant 0 : i32
    %c0_i32_0 = arith.constant 0 : i32
    %c0_i32_1 = arith.constant 0 : i32
    return %c0_i32, %c0_i32_0 : i32, i32
  }
  func.func @transform_6(%arg0: i32, %arg1: i32, %arg2: memref<2xi32, #tpu.memory_space<smem>>) -> (i32, i32) {
    %c0_i32 = arith.constant 0 : i32
    %c0_i32_0 = arith.constant 0 : i32
    %c0_i32_1 = arith.constant 0 : i32
    return %c0_i32, %c0_i32_0 : i32, i32
  }
  func.func @transform_7(%arg0: i32, %arg1: i32, %arg2: memref<2xi32, #tpu.memory_space<smem>>) -> (i32, i32, i32, i32) {
    %c0_i32 = arith.constant 0 : i32
    %c0_i32_0 = arith.constant 0 : i32
    %c0_i32_1 = arith.constant 0 : i32
    return %arg0, %arg1, %c0_i32, %c0_i32_0 : i32, i32, i32, i32
  }
}

</mosaic_0001>

<llo_original>
// kernel: tpu_custom_call.1
$region0: #{tpu_custom_call.1}
  #allocation0 [shape = 'u32[]', space=smem, size = 0x4, offset = 0x4, fixed_abs, tag = 'smem constant byte address 0x4 - core index']
  #allocation1 [shape = 'u32[72,128]{1,0:T(1,128)}', space=vmem, size = 0x9000, scoped, tag = 'internal scratch']
  #allocation2 [shape = 's32[1]{0}', space=sflag, size = 0x4, scoped, tag = 'scoped memory for tpu_custom_call.1']
  #allocation3 [shape = 'u8[512]{0}', space=smem, size = 0x200, scoped, tag = 'prefetched SMEM operand 0']
  #allocation4 [shape = 'f32[1,1]{1,0:T(1,128)S(6)}', space=smem, size = 0x200, scoped, tag = 'scoped memory for tpu_custom_call.1']
  %s0 = inlined_call_operand.hbm [shape: s32[2], index: 0, kind: input, shape index: {}]
  %s1 = inlined_call_operand.hbm [shape: bf16[2,1,16,16], index: 1, kind: input, shape index: {}]
  %s2 = inlined_call_operand.hbm [shape: bf16[3,16,256], index: 2, kind: input, shape index: {}]
  %s3 = inlined_call_operand.vmem [shape: f32[1,256], index: 3, kind: input, shape index: {}]
  %s4 = inlined_call_operand.hbm [shape: bf16[3,256,256], index: 4, kind: input, shape index: {}]
  %s5 = inlined_call_operand.vmem [shape: f32[1,256], index: 5, kind: input, shape index: {}]
  %s6 = inlined_call_operand.hbm [shape: bf16[8,256], index: 6, kind: input, shape index: {}]
  %s7 = inlined_call_operand.<no memory space> [shape: f32[1,1], index: 7, kind: input, shape index: {}]
  %s8 = inlined_call_operand.hbm [shape: f32[2,1,8,8], index: 8, kind: output, shape index: {}]
  %s9 = sld [smem:[#allocation0]]
  $region77: #{tpu_custom_call.1} parent=0
    _
  %s11 = ssub.s32 1, %s9
  %s12 = scalar_select 0, %s11, %s9
  %s14 = sshll.u32 %s0, 4
  %s15 = int_to_ptr.hbm [resolvable:$true] %s14
  %17 = dma.hbm_to_smem %s15, 16, [#allocation3], [#allocation2]
  %18 = sst [smem:[#allocation4]] %s7
  %20 = dma.done [#allocation2], 16
  %21 = sfence
  $region1: #{tpu_custom_call.1} parent=0
    #allocation5 [shape = 'u8[8192]{0}', space=vmem, size = 0x2000, scoped, tag = 'input window, operand 1']
    #allocation6 [shape = 's32[2]{0}', space=sflag, size = 0x8, scoped, tag = 'scoped memory for tpu_custom_call.1']
    #allocation7 [shape = 's32[2]{0}', space=sflag, size = 0x8, scoped, tag = 'scoped memory for tpu_custom_call.1']
    #allocation8 [shape = 'u8[24576]{0}', space=vmem, size = 0x6000, scoped, tag = 'input window, operand 2, single buffered']
    #allocation9 [shape = 's32[1]{0}', space=sflag, size = 0x4, scoped, tag = 'scoped memory for tpu_custom_call.1']
    #allocation10 [shape = 'u8[393216]{0}', space=vmem, size = 0x60000, scoped, tag = 'input window, operand 4, single buffered']
    #allocation11 [shape = 'u8[4096]{0}', space=vmem, size = 0x1000, scoped, tag = 'input window, operand 6, single buffered']
    #allocation12 [shape = 's32[1]{0}', space=sflag, size = 0x4, scoped, tag = 'scoped memory for tpu_custom_call.1']
    #allocation13 [shape = 'u8[8192]{0}', space=vmem, size = 0x2000, scoped, tag = 'output window, operand 0']
    %22 = vsyncpa [#allocation6], 0
    %s23 = scalar_lea.sflag [#allocation6], 1
    %24 = vsyncpa %s23, 0
    %25 = vsyncpa [#allocation9], 0
    %26 = vsyncpa [#allocation12], 0
    %27 = vsyncpa [#allocation7], 0
    %s28 = scalar_lea.sflag [#allocation7], 1
    %29 = vsyncpa %s28, 0
    loop: start=0, step=1, limit=4
    $region2: #{tpu_custom_call.1} parent=1 // loop_pre_header
      _
    $region3: #{tpu_custom_call.1} parent=1 // loop_header
      %s31 = sphi 0, %s35
      %p32 = scmp.ge.s32.totalorder %s31, 4
      %s38 = sphi 0, %s50
      %s39 = sphi 0, %s46
      %s40 = sphi 0, %s38
      %s41 = sphi 0, %s39
      %s42 = sphi 0, %s40
      %s43 = sphi 0, %s41
      %s55 = sphi 0, %s57
      %s58 = sphi 0, %s55
      %s59 = sphi 0, %s58
      %s75 = sphi 0, %s59
      %s79 = sphi 0, %s79
      %s81 = sphi 0, %s79
      %s82 = sphi 0, %s81
      %s96 = sphi 0, %s82
      %s100 = sphi 0, %s100
      %s102 = sphi 0, %s100
      %s103 = sphi 0, %s102
      %s117 = sphi 0, %s103
      %s121 = sphi 0, %s121
      %s123 = sphi 0, %s121
      %s124 = sphi 0, %s123
      %s138 = sphi 0, %s124
      %s142 = sphi 0, %s142
      %s144 = sphi 0, %s142
      %s145 = sphi 0, %s144
      %s159 = sphi 0, %s145
      %s163 = sphi 0, %s163
      %s165 = sphi 0, %s163
      %s166 = sphi 0, %s165
      %s180 = sphi 0, %s166
      %s184 = sphi 0, %s184
      %s186 = sphi 0, %s184
      %s187 = sphi 0, %s186
      %s201 = sphi 0, %s187
      %s209 = sphi 0, %s211
      %s212 = sphi 0, %s209
      %s213 = sphi 0, %s212
      %s229 = sphi 0, %s213
    $region4: #{tpu_custom_call.1} parent=1 // loop_header_branch
      %34 = sbr.rel (%p32) target = $region8
    $region5: #{tpu_custom_call.1} parent=1 // loop_body
      %s36 = ssub.s32 %s31, 1
      %s37 = ssub.s32 %s31, 2
      %s44 = sadd.s32 1, %s39
      %p45 = scmp.ge.s32.totalorder %s44, 1
      %s46 = scalar_select %p45, 0, %s44
      %s47 = sadd.s32 1, %s38
      %s48 = scalar_select %p45, %s47, %s38
      %p49 = scmp.ge.s32.totalorder %s48, 2
      %s50 = scalar_select %p49, 0, %s48
      %s51 = ssub.s32 %s38, %s50
      %s52 = ssub.s32 %s39, %s46
      %s53 = sor.u32 %s51, %s52
      %p54 = scmp.eq.s32.totalorder %s53, 0
      %s56 = sadd.s32 %s55, 1
      %s57 = scalar_select %p54, %s55, %s56
      %p60 = pneg %p54
      %p61 = scmp.eq.s32.totalorder %s31, 1
      %p62 = por %p60, %p61
      %p63 = scmp.ne.s32.totalorder %s55, %s58
      %p64 = scmp.eq.s32.totalorder %s31, 0
      %p65 = por %p63, %p64
      %p66 = scmp.ne.s32.totalorder %s55, %s58
      %p67 = scmp.eq.s32.totalorder %s36, 1
      %p68 = por %p66, %p67
      %p69 = scmp.ne.s32.totalorder %s58, %s59
      %p70 = scmp.eq.s32.totalorder %s36, 0
      %p71 = por %p69, %p70
      %p72 = scmp.ne.s32.totalorder %s58, %s59
      %p73 = scmp.eq.s32.totalorder %s37, 1
      %p74 = por %p72, %p73
      %p76 = scmp.ne.s32.totalorder %s59, %s75
      %p77 = scmp.eq.s32.totalorder %s37, 0
      %p78 = por %p76, %p77
      %s80 = sadd.s32 %s79, 1
      %p83 = scmp.eq.s32.totalorder %s31, 1
      %p84 = scmp.ne.s32.totalorder %s79, %s81
      %p85 = scmp.eq.s32.totalorder %s31, 0
      %p86 = por %p84, %p85
      %p87 = scmp.ne.s32.totalorder %s79, %s81
      %p88 = scmp.eq.s32.totalorder %s36, 1
      %p89 = por %p87, %p88
      %p90 = scmp.ne.s32.totalorder %s81, %s82
      %p91 = scmp.eq.s32.totalorder %s36, 0
      %p92 = por %p90, %p91
      %p93 = scmp.ne.s32.totalorder %s81, %s82
      %p94 = scmp.eq.s32.totalorder %s37, 1
      %p95 = por %p93, %p94
      %p97 = scmp.ne.s32.totalorder %s82, %s96
      %p98 = scmp.eq.s32.totalorder %s37, 0
      %p99 = por %p97, %p98
      %s101 = sadd.s32 %s100, 1
      %p104 = scmp.eq.s32.totalorder %s31, 1
      %p105 = scmp.ne.s32.totalorder %s100, %s102
      %p106 = scmp.eq.s32.totalorder %s31, 0
      %p107 = por %p105, %p106
      %p108 = scmp.ne.s32.totalorder %s100, %s102
      %p109 = scmp.eq.s32.totalorder %s36, 1
      %p110 = por %p108, %p109
      %p111 = scmp.ne.s32.totalorder %s102, %s103
      %p112 = scmp.eq.s32.totalorder %s36, 0
      %p113 = por %p111, %p112
      %p114 = scmp.ne.s32.totalorder %s102, %s103
      %p115 = scmp.eq.s32.totalorder %s37, 1
      %p116 = por %p114, %p115
      %p118 = scmp.ne.s32.totalorder %s103, %s117
      %p119 = scmp.eq.s32.totalorder %s37, 0
      %p120 = por %p118, %p119
      %s122 = sadd.s32 %s121, 1
      %p125 = scmp.eq.s32.totalorder %s31, 1
      %p126 = scmp.ne.s32.totalorder %s121, %s123
      %p127 = scmp.eq.s32.totalorder %s31, 0
      %p128 = por %p126, %p127
      %p129 = scmp.ne.s32.totalorder %s121, %s123
      %p130 = scmp.eq.s32.totalorder %s36, 1
      %p131 = por %p129, %p130
      %p132 = scmp.ne.s32.totalorder %s123, %s124
      %p133 = scmp.eq.s32.totalorder %s36, 0
      %p134 = por %p132, %p133
      %p135 = scmp.ne.s32.totalorder %s123, %s124
      %p136 = scmp.eq.s32.totalorder %s37, 1
      %p137 = por %p135, %p136
      %p139 = scmp.ne.s32.totalorder %s124, %s138
      %p140 = scmp.eq.s32.totalorder %s37, 0
      %p141 = por %p139, %p140
      %s143 = sadd.s32 %s142, 1
      %p146 = scmp.eq.s32.totalorder %s31, 1
      %p147 = scmp.ne.s32.totalorder %s142, %s144
      %p148 = scmp.eq.s32.totalorder %s31, 0
      %p149 = por %p147, %p148
      %p150 = scmp.ne.s32.totalorder %s142, %s144
      %p151 = scmp.eq.s32.totalorder %s36, 1
      %p152 = por %p150, %p151
      %p153 = scmp.ne.s32.totalorder %s144, %s145
      %p154 = scmp.eq.s32.totalorder %s36, 0
      %p155 = por %p153, %p154
      %p156 = scmp.ne.s32.totalorder %s144, %s145
      %p157 = scmp.eq.s32.totalorder %s37, 1
      %p158 = por %p156, %p157
      %p160 = scmp.ne.s32.totalorder %s145, %s159
      %p161 = scmp.eq.s32.totalorder %s37, 0
      %p162 = por %p160, %p161
      %s164 = sadd.s32 %s163, 1
      %p167 = scmp.eq.s32.totalorder %s31, 1
      %p168 = scmp.ne.s32.totalorder %s163, %s165
      %p169 = scmp.eq.s32.totalorder %s31, 0
      %p170 = por %p168, %p169
      %p171 = scmp.ne.s32.totalorder %s163, %s165
      %p172 = scmp.eq.s32.totalorder %s36, 1
      %p173 = por %p171, %p172
      %p174 = scmp.ne.s32.totalorder %s165, %s166
      %p175 = scmp.eq.s32.totalorder %s36, 0
      %p176 = por %p174, %p175
      %p177 = scmp.ne.s32.totalorder %s165, %s166
      %p178 = scmp.eq.s32.totalorder %s37, 1
      %p179 = por %p177, %p178
      %p181 = scmp.ne.s32.totalorder %s166, %s180
      %p182 = scmp.eq.s32.totalorder %s37, 0
      %p183 = por %p181, %p182
      %s185 = sadd.s32 %s184, 1
      %p188 = scmp.eq.s32.totalorder %s31, 1
      %p189 = scmp.ne.s32.totalorder %s184, %s186
      %p190 = scmp.eq.s32.totalorder %s31, 0
      %p191 = por %p189, %p190
      %p192 = scmp.ne.s32.totalorder %s184, %s186
      %p193 = scmp.eq.s32.totalorder %s36, 1
      %p194 = por %p192, %p193
      %p195 = scmp.ne.s32.totalorder %s186, %s187
      %p196 = scmp.eq.s32.totalorder %s36, 0
      %p197 = por %p195, %p196
      %p198 = scmp.ne.s32.totalorder %s186, %s187
      %p199 = scmp.eq.s32.totalorder %s37, 1
      %p200 = por %p198, %p199
      %p202 = scmp.ne.s32.totalorder %s187, %s201
      %p203 = scmp.eq.s32.totalorder %s37, 0
      %p204 = por %p202, %p203
      %s205 = ssub.s32 %s38, %s50
      %s206 = ssub.s32 %s39, %s46
      %s207 = sor.u32 %s205, %s206
      %p208 = scmp.eq.s32.totalorder %s207, 0
      %s210 = sadd.s32 %s209, 1
      %s211 = scalar_select %p208, %s209, %s210
      %p214 = pneg %p208
      %p215 = scmp.eq.s32.totalorder %s31, 1
      %p216 = por %p214, %p215
      %p217 = scmp.ne.s32.totalorder %s209, %s212
      %p218 = scmp.eq.s32.totalorder %s31, 0
      %p219 = por %p217, %p218
      %p220 = scmp.ne.s32.totalorder %s209, %s212
      %p221 = scmp.eq.s32.totalorder %s36, 1
      %p222 = por %p220, %p221
      %p223 = scmp.ne.s32.totalorder %s212, %s213
      %p224 = scmp.eq.s32.totalorder %s36, 0
      %p225 = por %p223, %p224
      %p226 = scmp.ne.s32.totalorder %s212, %s213
      %p227 = scmp.eq.s32.totalorder %s37, 1
      %p228 = por %p226, %p227
      %p230 = scmp.ne.s32.totalorder %s213, %s229
      %p231 = scmp.eq.s32.totalorder %s37, 0
      %p232 = por %p230, %p231
      %p233 = scmp.le.s32.totalorder 1, %s31
      %p234 = scmp.lt.s32.totalorder %s31, 3
      %p235 = pnand %p233, %p234
      %p236 = pneg %p235
      // Predicated region
      $region9: #{tpu_custom_call.1} parent=5 // pred_check
        _
      $region10: #{tpu_custom_call.1} parent=5 // pred_check_branch
        %238 = sbr.rel (%p235) target = $region12
      $region11: #{tpu_custom_call.1} parent=5 // pred_region
        %s239 = ssub.s32 %s31, 1
        // Predicated region
        $region13: #{tpu_custom_call.1} parent=11 // pred_check
          %p240 = pneg %p92
        $region14: #{tpu_custom_call.1} parent=11 // pred_check_branch
          %242 = sbr.rel (%p240) target = $region16
        $region15: #{tpu_custom_call.1} parent=11 // pred_region
          %244 = vsyncadd [#allocation9], 0
          %s245 = sshll.u32 %s2, 4
          %s246 = int_to_ptr.hbm [resolvable:$true] %s245
          %s247 = sshll.u32 [#allocation8], 4
          %s248 = int_to_ptr.vmem [resolvable:$true] %s247
          %253 = dma.hbm_to_vmem [thread:$0]  %s246, 768, %s248, [#allocation9], 128, 128, 8
        $region16: #{tpu_custom_call.1} parent=11 // pred_fallthru
          _
        // Predicated region
        $region17: #{tpu_custom_call.1} parent=11 // pred_check
          %p254 = pneg %p113
        $region18: #{tpu_custom_call.1} parent=11 // pred_check_branch
          %256 = sbr.rel (%p254) target = $region20
        $region19: #{tpu_custom_call.1} parent=11 // pred_region
          _
        $region20: #{tpu_custom_call.1} parent=11 // pred_fallthru
          _
        // Predicated region
        $region21: #{tpu_custom_call.1} parent=11 // pred_check
          %p257 = pneg %p134
        $region22: #{tpu_custom_call.1} parent=11 // pred_check_branch
          %259 = sbr.rel (%p257) target = $region24
        $region23: #{tpu_custom_call.1} parent=11 // pred_region
          %261 = vsyncadd [#allocation9], 0
          %s262 = sshll.u32 %s4, 4
          %s263 = int_to_ptr.hbm [resolvable:$true] %s262
          %s264 = sshll.u32 [#allocation10], 4
          %s265 = int_to_ptr.vmem [resolvable:$true] %s264
          %270 = dma.hbm_to_vmem [thread:$0]  %s263, 12288, %s265, [#allocation9], 128, 128, 8
        $region24: #{tpu_custom_call.1} parent=11 // pred_fallthru
          _
        // Predicated region
        $region25: #{tpu_custom_call.1} parent=11 // pred_check
          %p271 = pneg %p155
        $region26: #{tpu_custom_call.1} parent=11 // pred_check_branch
          %273 = sbr.rel (%p271) target = $region28
        $region27: #{tpu_custom_call.1} parent=11 // pred_region
          _
        $region28: #{tpu_custom_call.1} parent=11 // pred_fallthru
          _
        // Predicated region
        $region29: #{tpu_custom_call.1} parent=11 // pred_check
          %p274 = pneg %p176
        $region30: #{tpu_custom_call.1} parent=11 // pred_check_branch
          %276 = sbr.rel (%p274) target = $region32
        $region31: #{tpu_custom_call.1} parent=11 // pred_region
          %278 = vsyncadd [#allocation12], 0
          %s280 = sshll.u32 %s6, 4
          %s281 = int_to_ptr.hbm [resolvable:$true] %s280
          %s282 = sshll.u32 [#allocation11], 4
          %s283 = int_to_ptr.vmem [resolvable:$true] %s282
          %285 = dma.hbm_to_vmem [thread:$0]  %s281, 128, %s283, [#allocation12]
        $region32: #{tpu_custom_call.1} parent=11 // pred_fallthru
          _
        // Predicated region
        $region33: #{tpu_custom_call.1} parent=11 // pred_check
          %p286 = pneg %p197
        $region34: #{tpu_custom_call.1} parent=11 // pred_check_branch
          %288 = sbr.rel (%p286) target = $region36
        $region35: #{tpu_custom_call.1} parent=11 // pred_region
          _
        $region36: #{tpu_custom_call.1} parent=11 // pred_fallthru
          _
      $region12: #{tpu_custom_call.1} parent=5 // pred_fallthru
        _
      %p289 = scmp.lt.s32.totalorder %s31, 2
      // Predicated region
      $region37: #{tpu_custom_call.1} parent=5 // pred_check
        %p290 = pneg %p289
      $region38: #{tpu_custom_call.1} parent=5 // pred_check_branch
        %292 = sbr.rel (%p290) target = $region40
      $region39: #{tpu_custom_call.1} parent=5 // pred_region
        // Predicated region
        $region41: #{tpu_custom_call.1} parent=39 // pred_check
          %p293 = pneg %p65
        $region42: #{tpu_custom_call.1} parent=39 // pred_check_branch
          %295 = sbr.rel (%p293) target = $region44
        $region43: #{tpu_custom_call.1} parent=39 // pred_region
          %s296 = sand.u32 %s55, 1
          %s297 = scalar_lea.sflag [#allocation6], %s296
          %s298 = sand.u32 %s55, 1
          %s299 = smul.addr %s298, 8
          %s300 = scalar_lea.vmem [#allocation5], %s299
          %302 = vsyncadd %s297, 0
          %s303 = smul.addr %s39, 2
          %s304 = smul.addr %s38, 2
          %s305 = sadd.s32 %s303, %s304
          %s306 = smul.addr %s305, 4
          %s307 = scalar_lea.hbm %s1, %s306
          %s308 = sshll.u32 %s307, 4
          %s309 = int_to_ptr.hbm [resolvable:$true] %s308
          %s310 = sshll.u32 %s300, 4
          %s311 = int_to_ptr.vmem [resolvable:$true] %s310
          %316 = dma.hbm_to_vmem [thread:$0]  %s309, 128, %s311, %s297, 64, 64, 4
        $region44: #{tpu_custom_call.1} parent=39 // pred_fallthru
          _
      $region40: #{tpu_custom_call.1} parent=5 // pred_fallthru
        _
      %p317 = scmp.le.s32.totalorder 1, %s31
      %p318 = scmp.lt.s32.totalorder %s31, 3
      %p319 = pnand %p317, %p318
      %p320 = pneg %p319
      // Predicated region
      $region45: #{tpu_custom_call.1} parent=5 // pred_check
        _
      $region46: #{tpu_custom_call.1} parent=5 // pred_check_branch
        %322 = sbr.rel (%p319) target = $region48
      $region47: #{tpu_custom_call.1} parent=5 // pred_region
        %s323 = ssub.s32 %s31, 1
        %s324 = sand.u32 %s58, 1
        %s325 = scalar_lea.sflag [#allocation6], %s324
        %s326 = sand.u32 %s58, 1
        %s327 = smul.addr %s326, 8
        %s328 = scalar_lea.vmem [#allocation5], %s327
        // Predicated region
        $region49: #{tpu_custom_call.1} parent=47 // pred_check
          %p329 = pneg %p71
        $region50: #{tpu_custom_call.1} parent=47 // pred_check_branch
          %331 = sbr.rel (%p329) target = $region52
        $region51: #{tpu_custom_call.1} parent=47 // pred_region
          %333 = dma.done %s325, 128
        $region52: #{tpu_custom_call.1} parent=47 // pred_fallthru
          _
        // Predicated region
        $region53: #{tpu_custom_call.1} parent=47 // pred_check
          %p334 = pneg %p92
        $region54: #{tpu_custom_call.1} parent=47 // pred_check_branch
          %336 = sbr.rel (%p334) target = $region56
        $region55: #{tpu_custom_call.1} parent=47 // pred_region
          %338 = dma.done [#allocation9], 768
        $region56: #{tpu_custom_call.1} parent=47 // pred_fallthru
          _
        // Predicated region
        $region57: #{tpu_custom_call.1} parent=47 // pred_check
          %p339 = pneg %p134
        $region58: #{tpu_custom_call.1} parent=47 // pred_check_branch
          %341 = sbr.rel (%p339) target = $region60
        $region59: #{tpu_custom_call.1} parent=47 // pred_region
          %343 = dma.done [#allocation9], 12288
        $region60: #{tpu_custom_call.1} parent=47 // pred_fallthru
          _
        // Predicated region
        $region61: #{tpu_custom_call.1} parent=47 // pred_check
          %p344 = pneg %p176
        $region62: #{tpu_custom_call.1} parent=47 // pred_check_branch
          %346 = sbr.rel (%p344) target = $region64
        $region63: #{tpu_custom_call.1} parent=47 // pred_region
          %348 = dma.done [#allocation12], 128
        $region64: #{tpu_custom_call.1} parent=47 // pred_fallthru
          _
        %s349 = sand.u32 %s58, 1
        %s350 = scalar_lea.sflag [#allocation6], %s349
        %s351 = sand.u32 %s58, 1
        %s352 = smul.addr %s351, 8
        %s353 = scalar_lea.vmem [#allocation5], %s352
        %p354 = pneg %p71
        %p355 = pneg %p68
        %p356 = pneg %p92
        %p357 = pneg %p89
        %p358 = pneg %p113
        %p359 = pneg %p110
        %p360 = pneg %p134
        %p361 = pneg %p131
        %p362 = pneg %p155
        %p363 = pneg %p152
        %p364 = pneg %p176
        %p365 = pneg %p173
        %p366 = pneg %p197
        %p367 = pneg %p194
        %p368 = pneg %p225
        %p369 = pneg %p222
        %s370 = sand.u32 %s212, 1
        %s371 = scalar_lea.sflag [#allocation7], %s370
        %s372 = sand.u32 %s212, 1
        %s373 = smul.addr %s372, 8
        %s374 = scalar_lea.vmem [#allocation13], %s373
        %v376 = vlaneseq
        %v377 = vshrl.u32 %v376, 7
        %v378 = vadd.s32 %v377, 8
        %v379 = vld [vmem:[%s328] sm:$0xf]
        %v380 = vld [vmem:[%s328 + $0x4] sm:$0xf]
        %v381 = vunpack.c.l.bf16 %v379
        %v382 = vunpack.c.l.bf16 %v380
        %vm385 = vcmask 1046528
        %v386 = vrot.slane %v381, 1
        %v387 = vrot.slane %v382, 1
        %v388 = vsel %vm385, %v386, %v387
        %v392 = vsel %vm385, %v387, %v386
        %v393 = vpack.c.bf16 %v392, %v388
        %vm394 = vcmask 1045504
        %v395 = vrot.slane %v381, 2
        %v396 = vrot.slane %v382, 2
        %v397 = vsel %vm394, %v395, %v396
        %v401 = vsel %vm394, %v396, %v395
        %v402 = vpack.c.bf16 %v401, %v397
        %v403 = vld [vmem:[#allocation8] sm:$0xff]
        %v404 = vld [vmem:[#allocation8 + $0x8] sm:$0xff]
        %s405 = scalar_lea.vmem [#allocation8], 16
        %v406 = vld [vmem:[%s405] sm:$0xff]
        %v407 = vld [vmem:[%s405 + $0x8] sm:$0xff]
        %v410 = vunpack.c.l.b16 %v406
        %v411 = vunpack.c.h.b16 %v406
        %v412 = vunpack.c.l.b16 %v407
        %v413 = vunpack.c.h.b16 %v407
        %v414 = vpack.c.b16 %v412, %v410
        %v415 = vpack.c.b16 %v413, %v411
        %vm418 = vcmask 130048
        %v420 = vsel %vm418, %v393, 0
        %422 = vmatpush.bf16.msra.mxu0 0
        %423 = vmatpush.bf16.msra.mxu0 0
        %424 = vmatpush.bf16.msra.mxu0 0
        %425 = vmatpush.bf16.msra.mxu0 0
        %426 = vmatpush.bf16.msra.mxu0 0
        %427 = vmatpush.bf16.msra.mxu0 0
        %428 = vmatpush.bf16.msra.mxu0 0
        %429 = vmatpush.bf16.msra.mxu0 %v414
        %430 = vmatmul.bf16.gmra.mxu0 %v420
        %v431 = vpop.f32.mrf.mxu0
        %v432 = vadd.f32 0.0, %v431
        %v433 = vpop.f32.mrf.mxu0
        %v434 = vadd.f32 0.0, %v433
        %435 = vdwg.mxu0
        %436 = vmatpush.bf16.msra.mxu0 0
        %437 = vmatpush.bf16.msra.mxu0 0
        %438 = vmatpush.bf16.msra.mxu0 0
        %439 = vmatpush.bf16.msra.mxu0 0
        %440 = vmatpush.bf16.msra.mxu0 0
        %441 = vmatpush.bf16.msra.mxu0 0
        %442 = vmatpush.bf16.msra.mxu0 0
        %443 = vmatpush.bf16.msra.mxu0 %v415
        %444 = vmatmul.bf16.gmra.mxu0 %v420
        %v445 = vpop.f32.mrf.mxu0
        %v446 = vadd.f32 0.0, %v445
        %v447 = vpop.f32.mrf.mxu0
        %v448 = vadd.f32 0.0, %v447
        %449 = vdwg.mxu0
        %v452 = vunpack.c.l.b16 %v379
        %v453 = vunpack.c.l.b16 %v380
        %v454 = vpack.c.b16 %v453, %v452
        %v457 = vunpack.c.l.b16 %v403
        %v458 = vunpack.c.h.b16 %v403
        %v459 = vunpack.c.l.b16 %v404
        %v460 = vunpack.c.h.b16 %v404
        %v461 = vpack.c.b16 %v459, %v457
        %v462 = vpack.c.b16 %v460, %v458
        %v466 = vsel %vm418, %v454, 0
        %468 = vmatpush.bf16.msra.mxu0 0
        %469 = vmatpush.bf16.msra.mxu0 0
        %470 = vmatpush.bf16.msra.mxu0 0
        %471 = vmatpush.bf16.msra.mxu0 0
        %472 = vmatpush.bf16.msra.mxu0 0
        %473 = vmatpush.bf16.msra.mxu0 0
        %474 = vmatpush.bf16.msra.mxu0 0
        %475 = vmatpush.bf16.msra.mxu0 %v461
        %476 = vmatmul.bf16.gmra.mxu0 %v466
        %v477 = vpop.f32.mrf.mxu0
        %v478 = vadd.f32 %v432, %v477
        %v479 = vpop.f32.mrf.mxu0
        %v480 = vadd.f32 %v434, %v479
        %481 = vdwg.mxu0
        %482 = vmatpush.bf16.msra.mxu0 0
        %483 = vmatpush.bf16.msra.mxu0 0
        %484 = vmatpush.bf16.msra.mxu0 0
        %485 = vmatpush.bf16.msra.mxu0 0
        %486 = vmatpush.bf16.msra.mxu0 0
        %487 = vmatpush.bf16.msra.mxu0 0
        %488 = vmatpush.bf16.msra.mxu0 0
        %489 = vmatpush.bf16.msra.mxu0 %v462
        %490 = vmatmul.bf16.gmra.mxu0 %v466
        %v491 = vpop.f32.mrf.mxu0
        %v492 = vadd.f32 %v446, %v491
        %v493 = vpop.f32.mrf.mxu0
        %v494 = vadd.f32 %v448, %v493
        %495 = vdwg.mxu0
        %s496 = scalar_lea.vmem [#allocation8], 32
        %v497 = vld [vmem:[%s496] sm:$0xff]
        %v498 = vld [vmem:[%s496 + $0x8] sm:$0xff]
        %v501 = vunpack.c.l.b16 %v497
        %v502 = vunpack.c.h.b16 %v497
        %v503 = vunpack.c.l.b16 %v498
        %v504 = vunpack.c.h.b16 %v498
        %v505 = vpack.c.b16 %v503, %v501
        %v506 = vpack.c.b16 %v504, %v502
        %v510 = vsel %vm418, %v402, 0
        %512 = vmatpush.bf16.msra.mxu0 0
        %513 = vmatpush.bf16.msra.mxu0 0
        %514 = vmatpush.bf16.msra.mxu0 0
        %515 = vmatpush.bf16.msra.mxu0 0
        %516 = vmatpush.bf16.msra.mxu0 0
        %517 = vmatpush.bf16.msra.mxu0 0
        %518 = vmatpush.bf16.msra.mxu0 0
        %519 = vmatpush.bf16.msra.mxu0 %v505
        %520 = vmatmul.bf16.gmra.mxu0 %v510
        %v521 = vpop.f32.mrf.mxu0
        %v522 = vadd.f32 0.0, %v521
        %v523 = vpop.f32.mrf.mxu0
        %v524 = vadd.f32 0.0, %v523
        %525 = vdwg.mxu0
        %526 = vmatpush.bf16.msra.mxu0 0
        %527 = vmatpush.bf16.msra.mxu0 0
        %528 = vmatpush.bf16.msra.mxu0 0
        %529 = vmatpush.bf16.msra.mxu0 0
        %530 = vmatpush.bf16.msra.mxu0 0
        %531 = vmatpush.bf16.msra.mxu0 0
        %532 = vmatpush.bf16.msra.mxu0 0
        %533 = vmatpush.bf16.msra.mxu0 %v506
        %534 = vmatmul.bf16.gmra.mxu0 %v510
        %v535 = vpop.f32.mrf.mxu0
        %v536 = vadd.f32 0.0, %v535
        %v537 = vpop.f32.mrf.mxu0
        %v538 = vadd.f32 0.0, %v537
        %539 = vdwg.mxu0
        %v540 = vadd.f32 %v478, %v522
        %v541 = vadd.f32 %v492, %v536
        %v542 = vadd.f32 %v480, %v524
        %v543 = vadd.f32 %v494, %v538
        %v544 = vld [vmem:[%s3] sm:$0x3]
        %v546 = vperm.slane %v544, 0
        %v547 = vperm.slane %v544, 1
        %v550 = vadd.f32 %v540, %v546
        %v551 = vadd.f32 %v541, %v547
        %v552 = vadd.f32 %v542, %v546
        %v553 = vadd.f32 %v543, %v547
        %v554 = vmax.f32 %v550, 0.0
        %v555 = vmax.f32 %v551, 0.0
        %v556 = vmax.f32 %v552, 0.0
        %v557 = vmax.f32 %v553, 0.0
        %s558 = smul.u32 %s41, 8
        %s559 = ssub.s32 %s558, 1
        %v560 = vstv %s559
        %v561 = vadd.s32 %v560, %v377
        %v562 = vadd.s32 %v560, %v378
        %vm563 = vcmp.ge.s32.totalorder %v561, 0
        %vm564 = vcmp.ge.s32.totalorder %v562, 0
        %vm565 = vcmp.lt.s32.totalorder %v561, 8
        %vm566 = vcmp.lt.s32.totalorder %v562, 8
        %vm567 = vmand %vm563, %vm565
        %vm568 = vmand %vm564, %vm566
        %v569 = vsel %vm567, 1, 0
        %v570 = vsel %vm568, 1, 0
        %vm571 = vcmp.eq.s32.totalorder %v569, 1
        %vm572 = vcmp.eq.s32.totalorder %v570, 1
        %v573 = vsel %vm571, %v554, 0.0
        %v574 = vsel %vm571, %v555, 0.0
        %v575 = vsel %vm572, %v556, 0.0
        %v576 = vsel %vm572, %v557, 0.0
        %v577 = vpack.c.bf16 %v575, %v573
        %v578 = vpack.c.bf16 %v576, %v574
        %v583 = vrot.slane %v573, 1
        %v584 = vrot.slane %v575, 1
        %v585 = vsel %vm385, %v583, %v584
        %v586 = vrot.slane %v574, 1
        %v587 = vrot.slane %v576, 1
        %v588 = vsel %vm385, %v586, %v587
        %v595 = vsel %vm385, %v584, %v583
        %v596 = vsel %vm385, %v587, %v586
        %v597 = vpack.c.bf16 %v595, %v585
        %v598 = vpack.c.bf16 %v596, %v588
        %v599 = vrot.slane %v573, 2
        %v600 = vrot.slane %v575, 2
        %v601 = vsel %vm394, %v599, %v600
        %v602 = vrot.slane %v574, 2
        %v603 = vrot.slane %v576, 2
        %v604 = vsel %vm394, %v602, %v603
        %v611 = vsel %vm394, %v600, %v599
        %v612 = vsel %vm394, %v603, %v602
        %v613 = vpack.c.bf16 %v611, %v601
        %v614 = vpack.c.bf16 %v612, %v604
        %v615 = vld [vmem:[#allocation10] sm:$0xff]
        %v616 = vld [vmem:[#allocation10 + $0x8] sm:$0xff]
        %v617 = vld [vmem:[#allocation10 + $0x10] sm:$0xff]
        %v618 = vld [vmem:[#allocation10 + $0x18] sm:$0xff]
        %v619 = vld [vmem:[#allocation10 + $0x20] sm:$0xff]
        %v620 = vld [vmem:[#allocation10 + $0x28] sm:$0xff]
        %v621 = vld [vmem:[#allocation10 + $0x30] sm:$0xff]
        %v622 = vld [vmem:[#allocation10 + $0x38] sm:$0xff]
        %v623 = vld [vmem:[#allocation10 + $0x40] sm:$0xff]
        %v624 = vld [vmem:[#allocation10 + $0x48] sm:$0xff]
        %v625 = vld [vmem:[#allocation10 + $0x50] sm:$0xff]
        %v626 = vld [vmem:[#allocation10 + $0x58] sm:$0xff]
        %v627 = vld [vmem:[#allocation10 + $0x60] sm:$0xff]
        %v628 = vld [vmem:[#allocation10 + $0x68] sm:$0xff]
        %v629 = vld [vmem:[#allocation10 + $0x70] sm:$0xff]
        %v630 = vld [vmem:[#allocation10 + $0x78] sm:$0xff]
        %v631 = vld [vmem:[#allocation10 + $0x80] sm:$0xff]
        %v632 = vld [vmem:[#allocation10 + $0x88] sm:$0xff]
        %v633 = vld [vmem:[#allocation10 + $0x90] sm:$0xff]
        %v634 = vld [vmem:[#allocation10 + $0x98] sm:$0xff]
        %v635 = vld [vmem:[#allocation10 + $0xa0] sm:$0xff]
        %v636 = vld [vmem:[#allocation10 + $0xa8] sm:$0xff]
        %v637 = vld [vmem:[#allocation10 + $0xb0] sm:$0xff]
        %v638 = vld [vmem:[#allocation10 + $0xb8] sm:$0xff]
        %v639 = vld [vmem:[#allocation10 + $0xc0] sm:$0xff]
        %v640 = vld [vmem:[#allocation10 + $0xc8] sm:$0xff]
        %v641 = vld [vmem:[#allocation10 + $0xd0] sm:$0xff]
        %v642 = vld [vmem:[#allocation10 + $0xd8] sm:$0xff]
        %v643 = vld [vmem:[#allocation10 + $0xe0] sm:$0xff]
        %v644 = vld [vmem:[#allocation10 + $0xe8] sm:$0xff]
        %v645 = vld [vmem:[#allocation10 + $0xf0] sm:$0xff]
        %v646 = vld [vmem:[#allocation10 + $0xf8] sm:$0xff]
        %s647 = scalar_lea.vmem [#allocation10], 256
        %v648 = vld [vmem:[%s647] sm:$0xff]
        %v649 = vld [vmem:[%s647 + $0x8] sm:$0xff]
        %v650 = vld [vmem:[%s647 + $0x10] sm:$0xff]
        %v651 = vld [vmem:[%s647 + $0x18] sm:$0xff]
        %v652 = vld [vmem:[%s647 + $0x20] sm:$0xff]
        %v653 = vld [vmem:[%s647 + $0x28] sm:$0xff]
        %v654 = vld [vmem:[%s647 + $0x30] sm:$0xff]
        %v655 = vld [vmem:[%s647 + $0x38] sm:$0xff]
        %v656 = vld [vmem:[%s647 + $0x40] sm:$0xff]
        %v657 = vld [vmem:[%s647 + $0x48] sm:$0xff]
        %v658 = vld [vmem:[%s647 + $0x50] sm:$0xff]
        %v659 = vld [vmem:[%s647 + $0x58] sm:$0xff]
        %v660 = vld [vmem:[%s647 + $0x60] sm:$0xff]
        %v661 = vld [vmem:[%s647 + $0x68] sm:$0xff]
        %v662 = vld [vmem:[%s647 + $0x70] sm:$0xff]
        %v663 = vld [vmem:[%s647 + $0x78] sm:$0xff]
        %v664 = vld [vmem:[%s647 + $0x80] sm:$0xff]
        %v665 = vld [vmem:[%s647 + $0x88] sm:$0xff]
        %v666 = vld [vmem:[%s647 + $0x90] sm:$0xff]
        %v667 = vld [vmem:[%s647 + $0x98] sm:$0xff]
        %v668 = vld [vmem:[%s647 + $0xa0] sm:$0xff]
        %v669 = vld [vmem:[%s647 + $0xa8] sm:$0xff]
        %v670 = vld [vmem:[%s647 + $0xb0] sm:$0xff]
        %v671 = vld [vmem:[%s647 + $0xb8] sm:$0xff]
        %v672 = vld [vmem:[%s647 + $0xc0] sm:$0xff]
        %v673 = vld [vmem:[%s647 + $0xc8] sm:$0xff]
        %v674 = vld [vmem:[%s647 + $0xd0] sm:$0xff]
        %v675 = vld [vmem:[%s647 + $0xd8] sm:$0xff]
        %v676 = vld [vmem:[%s647 + $0xe0] sm:$0xff]
        %v677 = vld [vmem:[%s647 + $0xe8] sm:$0xff]
        %v678 = vld [vmem:[%s647 + $0xf0] sm:$0xff]
        %v679 = vld [vmem:[%s647 + $0xf8] sm:$0xff]
        %v712 = vunpack.c.l.b16 %v648
        %v713 = vunpack.c.h.b16 %v648
        %v714 = vunpack.c.l.b16 %v649
        %v715 = vunpack.c.h.b16 %v649
        %v716 = vunpack.c.l.b16 %v650
        %v717 = vunpack.c.h.b16 %v650
        %v718 = vunpack.c.l.b16 %v651
        %v719 = vunpack.c.h.b16 %v651
        %v720 = vunpack.c.l.b16 %v652
        %v721 = vunpack.c.h.b16 %v652
        %v722 = vunpack.c.l.b16 %v653
        %v723 = vunpack.c.h.b16 %v653
        %v724 = vunpack.c.l.b16 %v654
        %v725 = vunpack.c.h.b16 %v654
        %v726 = vunpack.c.l.b16 %v655
        %v727 = vunpack.c.h.b16 %v655
        %v728 = vunpack.c.l.b16 %v656
        %v729 = vunpack.c.h.b16 %v656
        %v730 = vunpack.c.l.b16 %v657
        %v731 = vunpack.c.h.b16 %v657
        %v732 = vunpack.c.l.b16 %v658
        %v733 = vunpack.c.h.b16 %v658
        %v734 = vunpack.c.l.b16 %v659
        %v735 = vunpack.c.h.b16 %v659
        %v736 = vunpack.c.l.b16 %v660
        %v737 = vunpack.c.h.b16 %v660
        %v738 = vunpack.c.l.b16 %v661
        %v739 = vunpack.c.h.b16 %v661
        %v740 = vunpack.c.l.b16 %v662
        %v741 = vunpack.c.h.b16 %v662
        %v742 = vunpack.c.l.b16 %v663
        %v743 = vunpack.c.h.b16 %v663
        %v744 = vunpack.c.l.b16 %v664
        %v745 = vunpack.c.h.b16 %v664
        %v746 = vunpack.c.l.b16 %v665
        %v747 = vunpack.c.h.b16 %v665
        %v748 = vunpack.c.l.b16 %v666
        %v749 = vunpack.c.h.b16 %v666
        %v750 = vunpack.c.l.b16 %v667
        %v751 = vunpack.c.h.b16 %v667
        %v752 = vunpack.c.l.b16 %v668
        %v753 = vunpack.c.h.b16 %v668
        %v754 = vunpack.c.l.b16 %v669
        %v755 = vunpack.c.h.b16 %v669
        %v756 = vunpack.c.l.b16 %v670
        %v757 = vunpack.c.h.b16 %v670
        %v758 = vunpack.c.l.b16 %v671
        %v759 = vunpack.c.h.b16 %v671
        %v760 = vunpack.c.l.b16 %v672
        %v761 = vunpack.c.h.b16 %v672
        %v762 = vunpack.c.l.b16 %v673
        %v763 = vunpack.c.h.b16 %v673
        %v764 = vunpack.c.l.b16 %v674
        %v765 = vunpack.c.h.b16 %v674
        %v766 = vunpack.c.l.b16 %v675
        %v767 = vunpack.c.h.b16 %v675
        %v768 = vunpack.c.l.b16 %v676
        %v769 = vunpack.c.h.b16 %v676
        %v770 = vunpack.c.l.b16 %v677
        %v771 = vunpack.c.h.b16 %v677
        %v772 = vunpack.c.l.b16 %v678
        %v773 = vunpack.c.h.b16 %v678
        %v774 = vunpack.c.l.b16 %v679
        %v775 = vunpack.c.h.b16 %v679
        %v776 = vpack.c.b16 %v714, %v712
        %v777 = vpack.c.b16 %v715, %v713
        %v778 = vpack.c.b16 %v718, %v716
        %v779 = vpack.c.b16 %v719, %v717
        %v780 = vpack.c.b16 %v722, %v720
        %v781 = vpack.c.b16 %v723, %v721
        %v782 = vpack.c.b16 %v726, %v724
        %v783 = vpack.c.b16 %v727, %v725
        %v784 = vpack.c.b16 %v730, %v728
        %v785 = vpack.c.b16 %v731, %v729
        %v786 = vpack.c.b16 %v734, %v732
        %v787 = vpack.c.b16 %v735, %v733
        %v788 = vpack.c.b16 %v738, %v736
        %v789 = vpack.c.b16 %v739, %v737
        %v790 = vpack.c.b16 %v742, %v740
        %v791 = vpack.c.b16 %v743, %v741
        %v792 = vpack.c.b16 %v746, %v744
        %v793 = vpack.c.b16 %v747, %v745
        %v794 = vpack.c.b16 %v750, %v748
        %v795 = vpack.c.b16 %v751, %v749
        %v796 = vpack.c.b16 %v754, %v752
        %v797 = vpack.c.b16 %v755, %v753
        %v798 = vpack.c.b16 %v758, %v756
        %v799 = vpack.c.b16 %v759, %v757
        %v800 = vpack.c.b16 %v762, %v760
        %v801 = vpack.c.b16 %v763, %v761
        %v802 = vpack.c.b16 %v766, %v764
        %v803 = vpack.c.b16 %v767, %v765
        %v804 = vpack.c.b16 %v770, %v768
        %v805 = vpack.c.b16 %v771, %v769
        %v806 = vpack.c.b16 %v774, %v772
        %v807 = vpack.c.b16 %v775, %v773
        %840 = vmatpush.bf16.msra.mxu0 %v790
        %841 = vmatpush.bf16.msra.mxu0 %v788
        %842 = vmatpush.bf16.msra.mxu0 %v786
        %843 = vmatpush.bf16.msra.mxu0 %v784
        %844 = vmatpush.bf16.msra.mxu0 %v782
        %845 = vmatpush.bf16.msra.mxu0 %v780
        %846 = vmatpush.bf16.msra.mxu0 %v778
        %847 = vmatpush.bf16.msra.mxu0 %v776
        %848 = vmatmul.bf16.gmra.mxu0 %v597
        %v849 = vpop.f32.mrf.mxu0
        %v850 = vadd.f32 0.0, %v849
        %v851 = vpop.f32.mrf.mxu0
        %852 = vdwg.mxu0
        %853 = vmatpush.bf16.msra.mxu0 %v806
        %854 = vmatpush.bf16.msra.mxu0 %v804
        %855 = vmatpush.bf16.msra.mxu0 %v802
        %856 = vmatpush.bf16.msra.mxu0 %v800
        %857 = vmatpush.bf16.msra.mxu0 %v798
        %858 = vmatpush.bf16.msra.mxu0 %v796
        %859 = vmatpush.bf16.msra.mxu0 %v794
        %860 = vmatpush.bf16.msra.mxu0 %v792
        %861 = vmatmul.bf16.gmra.mxu0 %v598
        %v862 = vpop.f32.mrf.mxu0
        %v863 = vadd.f32 %v850, %v862
        %v864 = vpop.f32.mrf.mxu0
        %865 = vdwg.mxu0
        %866 = vmatpush.bf16.msra.mxu0 %v791
        %867 = vmatpush.bf16.msra.mxu0 %v789
        %868 = vmatpush.bf16.msra.mxu0 %v787
        %869 = vmatpush.bf16.msra.mxu0 %v785
        %870 = vmatpush.bf16.msra.mxu0 %v783
        %871 = vmatpush.bf16.msra.mxu0 %v781
        %872 = vmatpush.bf16.msra.mxu0 %v779
        %873 = vmatpush.bf16.msra.mxu0 %v777
        %874 = vmatmul.bf16.gmra.mxu0 %v597
        %v875 = vpop.f32.mrf.mxu0
        %v876 = vadd.f32 0.0, %v875
        %v877 = vpop.f32.mrf.mxu0
        %878 = vdwg.mxu0
        %879 = vmatpush.bf16.msra.mxu0 %v807
        %880 = vmatpush.bf16.msra.mxu0 %v805
        %881 = vmatpush.bf16.msra.mxu0 %v803
        %882 = vmatpush.bf16.msra.mxu0 %v801
        %883 = vmatpush.bf16.msra.mxu0 %v799
        %884 = vmatpush.bf16.msra.mxu0 %v797
        %885 = vmatpush.bf16.msra.mxu0 %v795
        %886 = vmatpush.bf16.msra.mxu0 %v793
        %887 = vmatmul.bf16.gmra.mxu0 %v598
        %v888 = vpop.f32.mrf.mxu0
        %v889 = vadd.f32 %v876, %v888
        %v890 = vpop.f32.mrf.mxu0
        %891 = vdwg.mxu0
        %v924 = vunpack.c.l.b16 %v615
        %v925 = vunpack.c.h.b16 %v615
        %v926 = vunpack.c.l.b16 %v616
        %v927 = vunpack.c.h.b16 %v616
        %v928 = vunpack.c.l.b16 %v617
        %v929 = vunpack.c.h.b16 %v617
        %v930 = vunpack.c.l.b16 %v618
        %v931 = vunpack.c.h.b16 %v618
        %v932 = vunpack.c.l.b16 %v619
        %v933 = vunpack.c.h.b16 %v619
        %v934 = vunpack.c.l.b16 %v620
        %v935 = vunpack.c.h.b16 %v620
        %v936 = vunpack.c.l.b16 %v621
        %v937 = vunpack.c.h.b16 %v621
        %v938 = vunpack.c.l.b16 %v622
        %v939 = vunpack.c.h.b16 %v622
        %v940 = vunpack.c.l.b16 %v623
        %v941 = vunpack.c.h.b16 %v623
        %v942 = vunpack.c.l.b16 %v624
        %v943 = vunpack.c.h.b16 %v624
        %v944 = vunpack.c.l.b16 %v625
        %v945 = vunpack.c.h.b16 %v625
        %v946 = vunpack.c.l.b16 %v626
        %v947 = vunpack.c.h.b16 %v626
        %v948 = vunpack.c.l.b16 %v627
        %v949 = vunpack.c.h.b16 %v627
        %v950 = vunpack.c.l.b16 %v628
        %v951 = vunpack.c.h.b16 %v628
        %v952 = vunpack.c.l.b16 %v629
        %v953 = vunpack.c.h.b16 %v629
        %v954 = vunpack.c.l.b16 %v630
        %v955 = vunpack.c.h.b16 %v630
        %v956 = vunpack.c.l.b16 %v631
        %v957 = vunpack.c.h.b16 %v631
        %v958 = vunpack.c.l.b16 %v632
        %v959 = vunpack.c.h.b16 %v632
        %v960 = vunpack.c.l.b16 %v633
        %v961 = vunpack.c.h.b16 %v633
        %v962 = vunpack.c.l.b16 %v634
        %v963 = vunpack.c.h.b16 %v634
        %v964 = vunpack.c.l.b16 %v635
        %v965 = vunpack.c.h.b16 %v635
        %v966 = vunpack.c.l.b16 %v636
        %v967 = vunpack.c.h.b16 %v636
        %v968 = vunpack.c.l.b16 %v637
        %v969 = vunpack.c.h.b16 %v637
        %v970 = vunpack.c.l.b16 %v638
        %v971 = vunpack.c.h.b16 %v638
        %v972 = vunpack.c.l.b16 %v639
        %v973 = vunpack.c.h.b16 %v639
        %v974 = vunpack.c.l.b16 %v640
        %v975 = vunpack.c.h.b16 %v640
        %v976 = vunpack.c.l.b16 %v641
        %v977 = vunpack.c.h.b16 %v641
        %v978 = vunpack.c.l.b16 %v642
        %v979 = vunpack.c.h.b16 %v642
        %v980 = vunpack.c.l.b16 %v643
        %v981 = vunpack.c.h.b16 %v643
        %v982 = vunpack.c.l.b16 %v644
        %v983 = vunpack.c.h.b16 %v644
        %v984 = vunpack.c.l.b16 %v645
        %v985 = vunpack.c.h.b16 %v645
        %v986 = vunpack.c.l.b16 %v646
        %v987 = vunpack.c.h.b16 %v646
        %v988 = vpack.c.b16 %v926, %v924
        %v989 = vpack.c.b16 %v927, %v925
        %v990 = vpack.c.b16 %v930, %v928
        %v991 = vpack.c.b16 %v931, %v929
        %v992 = vpack.c.b16 %v934, %v932
        %v993 = vpack.c.b16 %v935, %v933
        %v994 = vpack.c.b16 %v938, %v936
        %v995 = vpack.c.b16 %v939, %v937
        %v996 = vpack.c.b16 %v942, %v940
        %v997 = vpack.c.b16 %v943, %v941
        %v998 = vpack.c.b16 %v946, %v944
        %v999 = vpack.c.b16 %v947, %v945
        %v1000 = vpack.c.b16 %v950, %v948
        %v1001 = vpack.c.b16 %v951, %v949
        %v1002 = vpack.c.b16 %v954, %v952
        %v1003 = vpack.c.b16 %v955, %v953
        %v1004 = vpack.c.b16 %v958, %v956
        %v1005 = vpack.c.b16 %v959, %v957
        %v1006 = vpack.c.b16 %v962, %v960
        %v1007 = vpack.c.b16 %v963, %v961
        %v1008 = vpack.c.b16 %v966, %v964
        %v1009 = vpack.c.b16 %v967, %v965
        %v1010 = vpack.c.b16 %v970, %v968
        %v1011 = vpack.c.b16 %v971, %v969
        %v1012 = vpack.c.b16 %v974, %v972
        %v1013 = vpack.c.b16 %v975, %v973
        %v1014 = vpack.c.b16 %v978, %v976
        %v1015 = vpack.c.b16 %v979, %v977
        %v1016 = vpack.c.b16 %v982, %v980
        %v1017 = vpack.c.b16 %v983, %v981
        %v1018 = vpack.c.b16 %v986, %v984
        %v1019 = vpack.c.b16 %v987, %v985
        %1052 = vmatpush.bf16.msra.mxu0 %v1002
        %1053 = vmatpush.bf16.msra.mxu0 %v1000
        %1054 = vmatpush.bf16.msra.mxu0 %v998
        %1055 = vmatpush.bf16.msra.mxu0 %v996
        %1056 = vmatpush.bf16.msra.mxu0 %v994
        %1057 = vmatpush.bf16.msra.mxu0 %v992
        %1058 = vmatpush.bf16.msra.mxu0 %v990
        %1059 = vmatpush.bf16.msra.mxu0 %v988
        %1060 = vmatmul.bf16.gmra.mxu0 %v577
        %v1061 = vpop.f32.mrf.mxu0
        %v1062 = vadd.f32 %v863, %v1061
        %v1063 = vpop.f32.mrf.mxu0
        %1064 = vdwg.mxu0
        %1065 = vmatpush.bf16.msra.mxu0 %v1018
        %1066 = vmatpush.bf16.msra.mxu0 %v1016
        %1067 = vmatpush.bf16.msra.mxu0 %v1014
        %1068 = vmatpush.bf16.msra.mxu0 %v1012
        %1069 = vmatpush.bf16.msra.mxu0 %v1010
        %1070 = vmatpush.bf16.msra.mxu0 %v1008
        %1071 = vmatpush.bf16.msra.mxu0 %v1006
        %1072 = vmatpush.bf16.msra.mxu0 %v1004
        %1073 = vmatmul.bf16.gmra.mxu0 %v578
        %v1074 = vpop.f32.mrf.mxu0
        %v1075 = vadd.f32 %v1062, %v1074
        %v1076 = vpop.f32.mrf.mxu0
        %1077 = vdwg.mxu0
        %1078 = vmatpush.bf16.msra.mxu0 %v1003
        %1079 = vmatpush.bf16.msra.mxu0 %v1001
        %1080 = vmatpush.bf16.msra.mxu0 %v999
        %1081 = vmatpush.bf16.msra.mxu0 %v997
        %1082 = vmatpush.bf16.msra.mxu0 %v995
        %1083 = vmatpush.bf16.msra.mxu0 %v993
        %1084 = vmatpush.bf16.msra.mxu0 %v991
        %1085 = vmatpush.bf16.msra.mxu0 %v989
        %1086 = vmatmul.bf16.gmra.mxu0 %v577
        %v1087 = vpop.f32.mrf.mxu0
        %v1088 = vadd.f32 %v889, %v1087
        %v1089 = vpop.f32.mrf.mxu0
        %1090 = vdwg.mxu0
        %1091 = vmatpush.bf16.msra.mxu0 %v1019
        %1092 = vmatpush.bf16.msra.mxu0 %v1017
        %1093 = vmatpush.bf16.msra.mxu0 %v1015
        %1094 = vmatpush.bf16.msra.mxu0 %v1013
        %1095 = vmatpush.bf16.msra.mxu0 %v1011
        %1096 = vmatpush.bf16.msra.mxu0 %v1009
        %1097 = vmatpush.bf16.msra.mxu0 %v1007
        %1098 = vmatpush.bf16.msra.mxu0 %v1005
        %1099 = vmatmul.bf16.gmra.mxu0 %v578
        %v1100 = vpop.f32.mrf.mxu0
        %v1101 = vadd.f32 %v1088, %v1100
        %v1102 = vpop.f32.mrf.mxu0
        %1103 = vdwg.mxu0
        %s1104 = scalar_lea.vmem [#allocation10], 512
        %v1105 = vld [vmem:[%s1104] sm:$0xff]
        %v1106 = vld [vmem:[%s1104 + $0x8] sm:$0xff]
        %v1107 = vld [vmem:[%s1104 + $0x10] sm:$0xff]
        %v1108 = vld [vmem:[%s1104 + $0x18] sm:$0xff]
        %v1109 = vld [vmem:[%s1104 + $0x20] sm:$0xff]
        %v1110 = vld [vmem:[%s1104 + $0x28] sm:$0xff]
        %v1111 = vld [vmem:[%s1104 + $0x30] sm:$0xff]
        %v1112 = vld [vmem:[%s1104 + $0x38] sm:$0xff]
        %v1113 = vld [vmem:[%s1104 + $0x40] sm:$0xff]
        %v1114 = vld [vmem:[%s1104 + $0x48] sm:$0xff]
        %v1115 = vld [vmem:[%s1104 + $0x50] sm:$0xff]
        %v1116 = vld [vmem:[%s1104 + $0x58] sm:$0xff]
        %v1117 = vld [vmem:[%s1104 + $0x60] sm:$0xff]
        %v1118 = vld [vmem:[%s1104 + $0x68] sm:$0xff]
        %v1119 = vld [vmem:[%s1104 + $0x70] sm:$0xff]
        %v1120 = vld [vmem:[%s1104 + $0x78] sm:$0xff]
        %v1121 = vld [vmem:[%s1104 + $0x80] sm:$0xff]
        %v1122 = vld [vmem:[%s1104 + $0x88] sm:$0xff]
        %v1123 = vld [vmem:[%s1104 + $0x90] sm:$0xff]
        %v1124 = vld [vmem:[%s1104 + $0x98] sm:$0xff]
        %v1125 = vld [vmem:[%s1104 + $0xa0] sm:$0xff]
        %v1126 = vld [vmem:[%s1104 + $0xa8] sm:$0xff]
        %v1127 = vld [vmem:[%s1104 + $0xb0] sm:$0xff]
        %v1128 = vld [vmem:[%s1104 + $0xb8] sm:$0xff]
        %v1129 = vld [vmem:[%s1104 + $0xc0] sm:$0xff]
        %v1130 = vld [vmem:[%s1104 + $0xc8] sm:$0xff]
        %v1131 = vld [vmem:[%s1104 + $0xd0] sm:$0xff]
        %v1132 = vld [vmem:[%s1104 + $0xd8] sm:$0xff]
        %v1133 = vld [vmem:[%s1104 + $0xe0] sm:$0xff]
        %v1134 = vld [vmem:[%s1104 + $0xe8] sm:$0xff]
        %v1135 = vld [vmem:[%s1104 + $0xf0] sm:$0xff]
        %v1136 = vld [vmem:[%s1104 + $0xf8] sm:$0xff]
        %v1169 = vunpack.c.l.b16 %v1105
        %v1170 = vunpack.c.h.b16 %v1105
        %v1171 = vunpack.c.l.b16 %v1106
        %v1172 = vunpack.c.h.b16 %v1106
        %v1173 = vunpack.c.l.b16 %v1107
        %v1174 = vunpack.c.h.b16 %v1107
        %v1175 = vunpack.c.l.b16 %v1108
        %v1176 = vunpack.c.h.b16 %v1108
        %v1177 = vunpack.c.l.b16 %v1109
        %v1178 = vunpack.c.h.b16 %v1109
        %v1179 = vunpack.c.l.b16 %v1110
        %v1180 = vunpack.c.h.b16 %v1110
        %v1181 = vunpack.c.l.b16 %v1111
        %v1182 = vunpack.c.h.b16 %v1111
        %v1183 = vunpack.c.l.b16 %v1112
        %v1184 = vunpack.c.h.b16 %v1112
        %v1185 = vunpack.c.l.b16 %v1113
        %v1186 = vunpack.c.h.b16 %v1113
        %v1187 = vunpack.c.l.b16 %v1114
        %v1188 = vunpack.c.h.b16 %v1114
        %v1189 = vunpack.c.l.b16 %v1115
        %v1190 = vunpack.c.h.b16 %v1115
        %v1191 = vunpack.c.l.b16 %v1116
        %v1192 = vunpack.c.h.b16 %v1116
        %v1193 = vunpack.c.l.b16 %v1117
        %v1194 = vunpack.c.h.b16 %v1117
        %v1195 = vunpack.c.l.b16 %v1118
        %v1196 = vunpack.c.h.b16 %v1118
        %v1197 = vunpack.c.l.b16 %v1119
        %v1198 = vunpack.c.h.b16 %v1119
        %v1199 = vunpack.c.l.b16 %v1120
        %v1200 = vunpack.c.h.b16 %v1120
        %v1201 = vunpack.c.l.b16 %v1121
        %v1202 = vunpack.c.h.b16 %v1121
        %v1203 = vunpack.c.l.b16 %v1122
        %v1204 = vunpack.c.h.b16 %v1122
        %v1205 = vunpack.c.l.b16 %v1123
        %v1206 = vunpack.c.h.b16 %v1123
        %v1207 = vunpack.c.l.b16 %v1124
        %v1208 = vunpack.c.h.b16 %v1124
        %v1209 = vunpack.c.l.b16 %v1125
        %v1210 = vunpack.c.h.b16 %v1125
        %v1211 = vunpack.c.l.b16 %v1126
        %v1212 = vunpack.c.h.b16 %v1126
        %v1213 = vunpack.c.l.b16 %v1127
        %v1214 = vunpack.c.h.b16 %v1127
        %v1215 = vunpack.c.l.b16 %v1128
        %v1216 = vunpack.c.h.b16 %v1128
        %v1217 = vunpack.c.l.b16 %v1129
        %v1218 = vunpack.c.h.b16 %v1129
        %v1219 = vunpack.c.l.b16 %v1130
        %v1220 = vunpack.c.h.b16 %v1130
        %v1221 = vunpack.c.l.b16 %v1131
        %v1222 = vunpack.c.h.b16 %v1131
        %v1223 = vunpack.c.l.b16 %v1132
        %v1224 = vunpack.c.h.b16 %v1132
        %v1225 = vunpack.c.l.b16 %v1133
        %v1226 = vunpack.c.h.b16 %v1133
        %v1227 = vunpack.c.l.b16 %v1134
        %v1228 = vunpack.c.h.b16 %v1134
        %v1229 = vunpack.c.l.b16 %v1135
        %v1230 = vunpack.c.h.b16 %v1135
        %v1231 = vunpack.c.l.b16 %v1136
        %v1232 = vunpack.c.h.b16 %v1136
        %v1233 = vpack.c.b16 %v1171, %v1169
        %v1234 = vpack.c.b16 %v1172, %v1170
        %v1235 = vpack.c.b16 %v1175, %v1173
        %v1236 = vpack.c.b16 %v1176, %v1174
        %v1237 = vpack.c.b16 %v1179, %v1177
        %v1238 = vpack.c.b16 %v1180, %v1178
        %v1239 = vpack.c.b16 %v1183, %v1181
        %v1240 = vpack.c.b16 %v1184, %v1182
        %v1241 = vpack.c.b16 %v1187, %v1185
        %v1242 = vpack.c.b16 %v1188, %v1186
        %v1243 = vpack.c.b16 %v1191, %v1189
        %v1244 = vpack.c.b16 %v1192, %v1190
        %v1245 = vpack.c.b16 %v1195, %v1193
        %v1246 = vpack.c.b16 %v1196, %v1194
        %v1247 = vpack.c.b16 %v1199, %v1197
        %v1248 = vpack.c.b16 %v1200, %v1198
        %v1249 = vpack.c.b16 %v1203, %v1201
        %v1250 = vpack.c.b16 %v1204, %v1202
        %v1251 = vpack.c.b16 %v1207, %v1205
        %v1252 = vpack.c.b16 %v1208, %v1206
        %v1253 = vpack.c.b16 %v1211, %v1209
        %v1254 = vpack.c.b16 %v1212, %v1210
        %v1255 = vpack.c.b16 %v1215, %v1213
        %v1256 = vpack.c.b16 %v1216, %v1214
        %v1257 = vpack.c.b16 %v1219, %v1217
        %v1258 = vpack.c.b16 %v1220, %v1218
        %v1259 = vpack.c.b16 %v1223, %v1221
        %v1260 = vpack.c.b16 %v1224, %v1222
        %v1261 = vpack.c.b16 %v1227, %v1225
        %v1262 = vpack.c.b16 %v1228, %v1226
        %v1263 = vpack.c.b16 %v1231, %v1229
        %v1264 = vpack.c.b16 %v1232, %v1230
        %1297 = vmatpush.bf16.msra.mxu0 %v1247
        %1298 = vmatpush.bf16.msra.mxu0 %v1245
        %1299 = vmatpush.bf16.msra.mxu0 %v1243
        %1300 = vmatpush.bf16.msra.mxu0 %v1241
        %1301 = vmatpush.bf16.msra.mxu0 %v1239
        %1302 = vmatpush.bf16.msra.mxu0 %v1237
        %1303 = vmatpush.bf16.msra.mxu0 %v1235
        %1304 = vmatpush.bf16.msra.mxu0 %v1233
        %1305 = vmatmul.bf16.gmra.mxu0 %v613
        %v1306 = vpop.f32.mrf.mxu0
        %v1307 = vadd.f32 0.0, %v1306
        %v1308 = vpop.f32.mrf.mxu0
        %1309 = vdwg.mxu0
        %1310 = vmatpush.bf16.msra.mxu0 %v1263
        %1311 = vmatpush.bf16.msra.mxu0 %v1261
        %1312 = vmatpush.bf16.msra.mxu0 %v1259
        %1313 = vmatpush.bf16.msra.mxu0 %v1257
        %1314 = vmatpush.bf16.msra.mxu0 %v1255
        %1315 = vmatpush.bf16.msra.mxu0 %v1253
        %1316 = vmatpush.bf16.msra.mxu0 %v1251
        %1317 = vmatpush.bf16.msra.mxu0 %v1249
        %1318 = vmatmul.bf16.gmra.mxu0 %v614
        %v1319 = vpop.f32.mrf.mxu0
        %v1320 = vadd.f32 %v1307, %v1319
        %v1321 = vpop.f32.mrf.mxu0
        %1322 = vdwg.mxu0
        %1323 = vmatpush.bf16.msra.mxu0 %v1248
        %1324 = vmatpush.bf16.msra.mxu0 %v1246
        %1325 = vmatpush.bf16.msra.mxu0 %v1244
        %1326 = vmatpush.bf16.msra.mxu0 %v1242
        %1327 = vmatpush.bf16.msra.mxu0 %v1240
        %1328 = vmatpush.bf16.msra.mxu0 %v1238
        %1329 = vmatpush.bf16.msra.mxu0 %v1236
        %1330 = vmatpush.bf16.msra.mxu0 %v1234
        %1331 = vmatmul.bf16.gmra.mxu0 %v613
        %v1332 = vpop.f32.mrf.mxu0
        %v1333 = vadd.f32 0.0, %v1332
        %v1334 = vpop.f32.mrf.mxu0
        %1335 = vdwg.mxu0
        %1336 = vmatpush.bf16.msra.mxu0 %v1264
        %1337 = vmatpush.bf16.msra.mxu0 %v1262
        %1338 = vmatpush.bf16.msra.mxu0 %v1260
        %1339 = vmatpush.bf16.msra.mxu0 %v1258
        %1340 = vmatpush.bf16.msra.mxu0 %v1256
        %1341 = vmatpush.bf16.msra.mxu0 %v1254
        %1342 = vmatpush.bf16.msra.mxu0 %v1252
        %1343 = vmatpush.bf16.msra.mxu0 %v1250
        %1344 = vmatmul.bf16.gmra.mxu0 %v614
        %v1345 = vpop.f32.mrf.mxu0
        %v1346 = vadd.f32 %v1333, %v1345
        %v1347 = vpop.f32.mrf.mxu0
        %1348 = vdwg.mxu0
        %v1349 = vadd.f32 %v1075, %v1320
        %v1350 = vadd.f32 %v1101, %v1346
        %v1351 = vld [vmem:[%s5] sm:$0x3]
        %v1353 = vperm.slane %v1351, 0
        %v1354 = vperm.slane %v1351, 1
        %v1357 = vadd.f32 %v1349, %v1353
        %v1358 = vadd.f32 %v1350, %v1354
        %v1359 = vmax.f32 %v1357, 0.0
        %v1360 = vmax.f32 %v1358, 0.0
        %v1361 = vstv %s558
        %v1362 = vadd.s32 %v1361, %v377
        %vm1363 = vcmp.ge.s32.totalorder %v1362, 0
        %vm1364 = vcmp.lt.s32.totalorder %v1362, 8
        %vm1365 = vmand %vm1363, %vm1364
        %v1366 = vsel %vm1365, 1, 0
        %vm1367 = vcmp.eq.s32.totalorder %v1366, 1
        %v1368 = vsel %vm1367, %v1359, 0.0
        %v1369 = vsel %vm1367, %v1360, 0.0
        %v1370 = vpack.c.bf16 %v1368, %v1368
        %v1371 = vpack.c.bf16 %v1369, %v1369
        %v1372 = vld [vmem:[#allocation11] sm:$0xff]
        %s1373 = sld [smem:[#allocation4]]
        %v1374 = vstv %s1373
        %v1376 = vunpack.c.l.b16 %v1372
        %v1377 = vunpack.c.h.b16 %v1372
        %v1378 = vpack.c.b16 %v1376, %v1376
        %v1379 = vpack.c.b16 %v1377, %v1377
        %1382 = vmatpush.bf16.xpose.msra.mxu0 0
        %1383 = vmatpush.bf16.xpose.msra.mxu0 0
        %1384 = vmatpush.bf16.xpose.msra.mxu0 0
        %1385 = vmatpush.bf16.xpose.msra.mxu0 0
        %1386 = vmatpush.bf16.xpose.msra.mxu0 0
        %1387 = vmatpush.bf16.xpose.msra.mxu0 0
        %1388 = vmatpush.bf16.xpose.msra.mxu0 0
        %1389 = vmatpush.bf16.xpose.msra.mxu0 %v1370
        %1390 = vmatmul.bf16.gmra.mxu0 %v1378
        %v1391 = vpop.f32.mrf.mxu0
        %v1392 = vadd.f32 %v1374, %v1391
        %v1393 = vpop.f32.mrf.mxu0
        %1394 = vdwg.mxu0
        %1395 = vmatpush.bf16.xpose.msra.mxu0 0
        %1396 = vmatpush.bf16.xpose.msra.mxu0 0
        %1397 = vmatpush.bf16.xpose.msra.mxu0 0
        %1398 = vmatpush.bf16.xpose.msra.mxu0 0
        %1399 = vmatpush.bf16.xpose.msra.mxu0 0
        %1400 = vmatpush.bf16.xpose.msra.mxu0 0
        %1401 = vmatpush.bf16.xpose.msra.mxu0 0
        %1402 = vmatpush.bf16.xpose.msra.mxu0 %v1371
        %1403 = vmatmul.bf16.gmra.mxu0 %v1379
        %v1404 = vpop.f32.mrf.mxu0
        %v1405 = vadd.f32 %v1392, %v1404
        %v1406 = vpop.f32.mrf.mxu0
        %1407 = vdwg.mxu0
        %v1408 = vxor.u32 %v1405, 2147483648
        %v1409 = vmul.f32 %v1408, 1.442695
        %v1410 = vpow.pop %v1409
        %v1411 = vadd.f32 %v1410, 1.0
        %v1412 = vrcp.pop %v1411
        %v1413 = vmul.f32 %v1411, %v1412
        %v1414 = vsub.f32 1.0, %v1413
        %v1415 = vmul.f32 %v1412, %v1414
        %v1416 = vadd.f32 %v1412, %v1415
        %vm1417 = vweird.f32 %v1411
        %vm1418 = vweird.f32 %v1412
        %vm1419 = vmor %vm1417, %vm1418
        %v1420 = vsel %vm1419, %v1412, %v1416
        %v1421 = vand.u32 2147483647, %v1411
        %vm1422 = vcmp.eq.f32.partialorder %v1421, 8.507059e+37
        %v1423 = vand.u32 %v1411, 2147483648
        %v1424 = vor.u32 1.1754944e-38, %v1423
        %v1425 = vsel %vm1422, %v1424, %v1420
        %v1426 = vmul.f32 1.0, %v1425
        %v1427 = vlaneseq
        %v1428 = vand.u32 %v1427, 127
        %v1429 = vadd.s32 %v1361, %v1428
        %s1430 = sld [smem:[#allocation3 + %s40]]
        %v1431 = vstv %s1430
        %vm1432 = vcmp.lt.s32.totalorder %v1429, %v1431
        %v1433 = vsel %vm1432, %v1426, 0.0
        %vm1434 = vcmask 64512
        %1435 = vst.msk [vmem:[%s374] sm:$0xff] %vm1434, %v1433
        %s1436 = sand.u32 %s212, 1
        %s1437 = scalar_lea.sflag [#allocation7], %s1436
        %s1438 = sand.u32 %s212, 1
        %s1439 = smul.addr %s1438, 8
        %s1440 = scalar_lea.vmem [#allocation13], %s1439
        // Predicated region
        $region65: #{tpu_custom_call.1} parent=47 // pred_check
          %p1441 = pneg %p222
        $region66: #{tpu_custom_call.1} parent=47 // pred_check_branch
          %1443 = sbr.rel (%p1441) target = $region68
        $region67: #{tpu_custom_call.1} parent=47 // pred_region
          %1445 = vsyncadd %s1437, 0
          %s1446 = sadd.s32 %s41, %s40
          %s1447 = smul.addr %s1446, 8
          %s1448 = scalar_lea.hbm %s8, %s1447
          %s1450 = sshll.u32 %s1440, 4
          %s1451 = int_to_ptr.vmem [resolvable:$true] %s1450
          %s1452 = sshll.u32 %s1448, 4
          %s1453 = int_to_ptr.hbm [resolvable:$true] %s1452
          %1455 = dma.vmem_to_hbm [thread:$0]  %s1451, 128, %s1453, %s1437
        $region68: #{tpu_custom_call.1} parent=47 // pred_fallthru
          _
      $region48: #{tpu_custom_call.1} parent=5 // pred_fallthru
        _
      %p1456 = scmp.le.s32.totalorder 2, %s31
      // Predicated region
      $region69: #{tpu_custom_call.1} parent=5 // pred_check
        %p1457 = pneg %p1456
      $region70: #{tpu_custom_call.1} parent=5 // pred_check_branch
        %1459 = sbr.rel (%p1457) target = $region72
      $region71: #{tpu_custom_call.1} parent=5 // pred_region
        %s1460 = ssub.s32 %s31, 2
        // Predicated region
        $region73: #{tpu_custom_call.1} parent=71 // pred_check
          %p1461 = pneg %p228
        $region74: #{tpu_custom_call.1} parent=71 // pred_check_branch
          %1463 = sbr.rel (%p1461) target = $region76
        $region75: #{tpu_custom_call.1} parent=71 // pred_region
          %s1464 = sand.u32 %s213, 1
          %s1465 = scalar_lea.sflag [#allocation7], %s1464
          %s1466 = sand.u32 %s213, 1
          %s1467 = smul.addr %s1466, 8
          %s1468 = scalar_lea.vmem [#allocation13], %s1467
          %1470 = dma.done %s1465, 128
        $region76: #{tpu_custom_call.1} parent=71 // pred_fallthru
          _
      $region72: #{tpu_custom_call.1} parent=5 // pred_fallthru
        _
    $region6: #{tpu_custom_call.1} parent=1 // loop_footer
      %s35 = sadd.s32 1, %s31
    $region7: #{tpu_custom_call.1} parent=1 // loop_footer_branch
      %30 = sbr.rel target = $region3
    $region8: #{tpu_custom_call.1} parent=1 // loop_exit
      _
    %1471 = vsyncpa [#allocation6], 1
    %s1472 = scalar_lea.sflag [#allocation6], 1
    %1473 = vsyncpa %s1472, 1
    %1474 = vsyncpa [#allocation9], 1
    %1475 = vsyncpa [#allocation12], 1
    %1476 = vsyncpa [#allocation7], 1
    %s1477 = scalar_lea.sflag [#allocation7], 1
    %1478 = vsyncpa %s1477, 1

</llo_original>
